<compile_context>
chip_gen: v6e
topology: v6e:2x2x1
jax: 0.10.0
libtpu: 0.0.40
codegen_flags: <defaults>
</compile_context>

<pallas_src>
import functools

import jax
import jax.numpy as jnp
from jax import lax
from jax.experimental import pallas as pl
from jax.experimental.pallas import tpu as pltpu

F_IN = 1024   # fixed by SegmentationGNN: GCN_Layer(1024, 128, ...)
F_HID = 128   # fixed by SegmentationGNN: GCN_Layer(1024, out_features=128)
LANE = 128    # pad num_classes up to this for lane-dense stores


# ---------------------------------------------------------------------------
# Fused Pallas kernel (Bt batch samples per grid step):
#   SCG adjacency (VMEM/vreg-resident, bf16 on the MXU) + two GCN layers
#   + z_hat residual.
# Refs:
#   z_ref    (Bt, N, KP)   bf16  mu, zero-padded beyond K
#   lv_ref   (Bt, N, KP)   bf16  logvar, zero-padded beyond K
#   x_ref    (Bt, N, 1024) bf16  node features
#   w1_ref   (1024, 128)   bf16  W1 with BN scale folded in
#   t1_ref   (1, 128)      f32   folded bias/BN shift
#   w2_ref   (128, KP)     bf16  W2 zero-padded beyond K
#   t2_ref   (1, KP)       f32   b2 zero-padded beyond K
#   o_ref    (Bt, N, KP)   f32   output (lane-dense; wrapper slices [:K])
# ---------------------------------------------------------------------------
def _fused_scg_gcn_kernel(z_ref, lv_ref, x_ref, w1_ref, t1_ref, w2_ref, t2_ref,
                          o_ref):
    bt, n, kp = z_ref.shape
    f_in = x_ref.shape[-1]
    f_hid = w1_ref.shape[-1]

    # ---- GCN layer 1 dense projection, all packed samples at once (bf16 MXU)
    x_all = x_ref[...].reshape(bt * n, f_in)                 # (Bt*N, 1024) bf16
    xw1_all = jnp.dot(x_all, w1_ref[...],
                      preferred_element_type=jnp.float32)    # (Bt*N, 128) f32

    w2 = w2_ref[...]                                         # (128, KP) bf16
    t1 = t1_ref[...]                                         # (1, 128) f32
    t2 = t2_ref[...]                                         # (1, KP)  f32

    # identity mask hoisted out of the per-sample loop
    ii = lax.broadcasted_iota(jnp.int32, (n, n), 0)
    jj = lax.broadcasted_iota(jnp.int32, (n, n), 1)
    eye = (ii == jj).astype(jnp.float32)

    for s in range(bt):                                      # Bt is small & static
        z16 = z_ref[s]                                       # (N, KP) bf16
        z = z16.astype(jnp.float32)
        lv = lv_ref[s].astype(jnp.float32)

        # ---- SCG adjacency: A = relu(z z^T) + gamma*diag + I  (bf16 MXU) ----
        a = lax.dot_general(z16, z16, (((1,), (1,)), ((), ())),
                            preferred_element_type=jnp.float32)   # (N, N) f32
        a = jnp.maximum(a, 0.0)

        # diag(relu(z z^T)) == ||z_i||^2  (no NxN mask-multiply needed)
        ad = jnp.sum(z * z, axis=-1, keepdims=True)          # (N, 1) f32
        mean_ad = jnp.mean(ad)
        gamma = jnp.sqrt(1.0 + 1.0 / (mean_ad + 1e-6))       # per-sample scalar

        a = a + eye * (gamma * ad + 1.0)                     # + gamma*diag(Ad) + I

        # symmetric normalization applied to features: D^-1/2 (A (D^-1/2 x))
        deg = jnp.sum(a, axis=-1, keepdims=True)             # lane reduce (A sym)
        dinv = lax.rsqrt(deg)

        a16 = a.astype(jnp.bfloat16)                         # bf16 A, reused twice

        # ---- GCN layer 1 (reassociated): A_norm @ (X W1s) + t1, BN folded ----
        xw1 = xw1_all[s * n:(s + 1) * n, :]                  # (N, 128) f32
        h1 = dinv * jnp.dot(a16, (dinv * xw1).astype(jnp.bfloat16),
                            preferred_element_type=jnp.float32)
        y1 = jnp.maximum(h1 + t1, 0.0)                       # Linear+BN(eval)+ReLU

        # ---- GCN layer 2: (A_norm @ y1) @ W2 + b2 ----------------------------
        h2 = dinv * jnp.dot(a16, (dinv * y1).astype(jnp.bfloat16),
                            preferred_element_type=jnp.float32)
        y2 = jnp.dot(h2.astype(jnp.bfloat16), w2,
                     preferred_element_type=jnp.float32)     # (N, KP)

        # ---- z_hat residual with per-sample gamma ----------------------------
        z_hat = gamma * z * (1.0 - lv)
        o_ref[s] = y2 + t2 + z_hat


def _samples_per_step(batch):
    # Pack samples per grid step (better MXU M-occupancy, amortized weight
    # loading) while keeping >= 2 grid steps so dimension_semantics=("parallel",)
    # can split work across the two TensorCores on v7x.
    if batch <= 1:
        return 1
    if batch % 2 == 0:
        return batch // 2
    return 1


def fused_scg_gcn(mu_p, lv_p, x_bf16, w1f, t1, w2_p, t2_p):
    B, N, KP = mu_p.shape
    f_in = x_bf16.shape[-1]
    f_hid = w1f.shape[-1]
    bt = _samples_per_step(B)
    steps = B // bt
    return pl.pallas_call(
        _fused_scg_gcn_kernel,
        out_shape=jax.ShapeDtypeStruct((B, N, KP), jnp.float32),
        grid_spec=pltpu.PrefetchScalarGridSpec(
            num_scalar_prefetch=0,
            grid=(steps,),
            in_specs=[
                pl.BlockSpec((bt, N, KP),   lambda b: (b, 0, 0)),   # mu (bf16, padded)
                pl.BlockSpec((bt, N, KP),   lambda b: (b, 0, 0)),   # logvar (bf16, padded)
                pl.BlockSpec((bt, N, f_in), lambda b: (b, 0, 0)),   # X (bf16)
                pl.BlockSpec((f_in, f_hid), lambda b: (0, 0)),      # W1*s1 (bf16)
                pl.BlockSpec((1, f_hid),    lambda b: (0, 0)),      # t1 (f32)
                pl.BlockSpec((f_hid, KP),   lambda b: (0, 0)),      # W2 (bf16, padded)
                pl.BlockSpec((1, KP),       lambda b: (0, 0)),      # b2 (f32, padded)
            ],
            out_specs=pl.BlockSpec((bt, N, KP), lambda b: (b, 0, 0)),
        ),
        compiler_params=pltpu.CompilerParams(
            dimension_semantics=("parallel",),
            vmem_limit_bytes=32 * 1024 * 1024,
        ),
    )(mu_p, lv_p, x_bf16, w1f, t1, w2_p, t2_p)


# ---------------------------------------------------------------------------
# Parameter initialization (deterministic, synthetic)
# ---------------------------------------------------------------------------
def init_params(key, c_in, num_classes):
    ks = jax.random.split(key, 8)
    scale = 0.02
    p = {
        # stand-in backbone: 1x1 conv c_in -> 1024
        "bb_w": jax.random.normal(ks[0], (F_IN, c_in, 1, 1), jnp.float32) * scale,
        "bb_b": jnp.zeros((F_IN,), jnp.float32),
        # SCG block convs (hidden_ch = num_classes)
        "mu_w": jax.random.normal(ks[1], (num_classes, F_IN, 3, 3), jnp.float32) * scale,
        "mu_b": jnp.zeros((num_classes,), jnp.float32),
        "lv_w": jax.random.normal(ks[2], (num_classes, F_IN, 1, 1), jnp.float32) * scale,
        "lv_b": jnp.zeros((num_classes,), jnp.float32),
        # GCN layer 1: Linear(1024 -> 128) + BatchNorm(eval) + ReLU
        "w1": jax.random.normal(ks[3], (F_IN, F_HID), jnp.float32) * scale,
        "b1": jnp.zeros((F_HID,), jnp.float32),
        "bn_gamma": jnp.ones((F_HID,), jnp.float32),
        "bn_beta": jnp.zeros((F_HID,), jnp.float32),
        "bn_rmean": jnp.zeros((F_HID,), jnp.float32),
        "bn_rvar": jnp.ones((F_HID,), jnp.float32),
        # GCN layer 2: Linear(128 -> num_classes), no BN, no activation
        "w2": jax.random.normal(ks[4], (F_HID, num_classes), jnp.float32) * scale,
        "b2": jnp.zeros((num_classes,), jnp.float32),
    }
    return p


# ---------------------------------------------------------------------------
# Forward pass (SegmentationGNN with 'scg-net' + 'gcn', eval mode)
# ---------------------------------------------------------------------------
def _conv_nchw(x, w, b, padding):
    y = lax.conv_general_dilated(
        x, w, window_strides=(1, 1), padding=padding,
        dimension_numbers=("NCHW", "OIHW", "NCHW"))
    return y + b[None, :, None, None]


@functools.partial(jax.jit, static_argnums=(2, 3))
def segmentation_gnn_forward(x, params, node_hw, num_classes):
    B, _, H, W = x.shape
    nh, nw = node_hw
    N = nh * nw
    K = num_classes
    KP = max(LANE, ((K + LANE - 1) // LANE) * LANE)   # lane-dense padded class dim
    eps = 1e-5

    # ---- stand-in backbone (1x1 conv to 1024 channels) --------------------
    # TODO(synk): SCG_Net's ResNet backbone source is not provided; stand-in projection.
    feat = _conv_nchw(x, params["bb_w"], params["bb_b"], "VALID")       # (B,1024,H,W)

    # ---- adaptive average pool to node grid --------------------------------
    gx = feat.reshape(B, F_IN, nh, H // nh, nw, W // nw).mean(axis=(3, 5))  # (B,1024,nh,nw)

    # ---- SCG block: mu / logvar convs (dropout = identity in eval) --------
    mu = _conv_nchw(gx, params["mu_w"], params["mu_b"], "SAME")          # (B,K,nh,nw)
    logvar = _conv_nchw(gx, params["lv_w"], params["lv_b"], "VALID")     # (B,K,nh,nw)

    # node-feature views: (B, N, feat); z = mu in eval mode
    mu_n = mu.transpose(0, 2, 3, 1).reshape(B, N, K)
    lv_n = logvar.transpose(0, 2, 3, 1).reshape(B, N, K)
    x_n = gx.transpose(0, 2, 3, 1).reshape(B, N, F_IN).astype(jnp.bfloat16)

    # ---- pad class dim to a full lane width (sliced back after the kernel) -
    # mu / logvar / W2 go in as bf16 (MXU-native, half the DMA traffic).
    pad = KP - K
    mu_p = jnp.pad(mu_n, ((0, 0), (0, 0), (0, pad))).astype(jnp.bfloat16)
    lv_p = jnp.pad(lv_n, ((0, 0), (0, 0), (0, pad))).astype(jnp.bfloat16)
    w2_p = jnp.pad(params["w2"], ((0, 0), (0, pad))).astype(jnp.bfloat16)
    t2_p = jnp.pad(params["b2"], ((0, pad)))[None, :]

    # ---- fold Linear bias + BatchNorm (eval) into W1 / shift ----------------
    # GCN_Layer order is fc(bmm(A, x)); BN scale folds into W1, shift into t1.
    s1 = params["bn_gamma"] / jnp.sqrt(params["bn_rvar"] + eps)
    t1 = ((params["b1"] - params["bn_rmean"]) * s1 + params["bn_beta"])[None, :]
    w1f = (params["w1"] * s1[None, :]).astype(jnp.bfloat16)

    # ---- fused SCG adjacency + two-layer GCN + residual (Pallas) ------------
    y = fused_scg_gcn(mu_p, lv_p, x_n, w1f, t1, w2_p, t2_p)             # (B,N,KP)
    y = y[:, :, :K]                                                     # (B,N,K)

    # ---- back to image layout and bilinear upsample ------------------------
    seg = y.reshape(B, nh, nw, K).transpose(0, 3, 1, 2)                 # (B,K,nh,nw)
    seg = jax.image.resize(seg, (B, K, H, W), method="bilinear")        # (B,K,H,W)
    return seg


if __name__ == "__main__":
    key = jax.random.PRNGKey(0)
    k_x, k_p = jax.random.split(key)

    B, C_IN, H, W = 2, 4, 16, 16
    NUM_CLASSES = 8
    NODE_HW = (16, 8)          # nb_nodes = 128 -> (128,128) adjacency, fully MXU/lane aligned

    x = jax.random.normal(k_x, (B, C_IN, H, W), jnp.float32)
    params = init_params(k_p, C_IN, NUM_CLASSES)

    out = segmentation_gnn_forward(x, params, NODE_HW, NUM_CLASSES)
    out = jax.block_until_ready(out)
    assert out.shape == (B, NUM_CLASSES, H, W), out.shape
    assert jnp.all(jnp.isfinite(out))
    print("KERNEL_OK")
</pallas_src>

<mosaic_0001>
module attributes {stable_mosaic.version = 11 : i64} {
  func.func @_fused_scg_gcn_kernel(%arg0: i32, %arg1: memref<1x128x128xbf16, #tpu.memory_space<vmem>>, %arg2: memref<1x128x128xbf16, #tpu.memory_space<vmem>>, %arg3: memref<1x128x1024xbf16, #tpu.memory_space<vmem>>, %arg4: memref<1024x128xbf16, #tpu.memory_space<vmem>>, %arg5: memref<1x128xf32, #tpu.memory_space<vmem>>, %arg6: memref<128x128xbf16, #tpu.memory_space<vmem>>, %arg7: memref<1x128xf32, #tpu.memory_space<vmem>>, %arg8: memref<1x128x128xf32, #tpu.memory_space<vmem>>) attributes {dimension_semantics = [#tpu.dimension_semantics<parallel>], iteration_bounds = array<i64: 2>, scalar_prefetch = 0 : i64, scratch_operands = 0 : i64, tpu.core_type = #tpu.core_type<tc>, window_params = [{transform_indices = @transform_0, window_bounds = array<i64: 1, 128, 128>}, {transform_indices = @transform_1, window_bounds = array<i64: 1, 128, 128>}, {transform_indices = @transform_2, window_bounds = array<i64: 1, 128, 1024>}, {pipeline_mode = #tpu.pipeline_mode<synchronous>, transform_indices = @transform_3, window_bounds = array<i64: 1024, 128>}, {pipeline_mode = #tpu.pipeline_mode<synchronous>, transform_indices = @transform_4, window_bounds = array<i64: 1, 128>}, {pipeline_mode = #tpu.pipeline_mode<synchronous>, transform_indices = @transform_5, window_bounds = array<i64: 128, 128>}, {pipeline_mode = #tpu.pipeline_mode<synchronous>, transform_indices = @transform_6, window_bounds = array<i64: 1, 128>}, {transform_indices = @transform_7, window_bounds = array<i64: 1, 128, 128>}]} {
    %c0 = arith.constant 0 : index
    %c0_0 = arith.constant 0 : index
    %c0_1 = arith.constant 0 : index
    %0 = vector.load %arg3[%c0, %c0_0, %c0_1] : memref<1x128x1024xbf16, #tpu.memory_space<vmem>>, vector<1x128x1024xbf16>
    %1 = vector.shape_cast %0 : vector<1x128x1024xbf16> to vector<128x1024xbf16>
    %c0_2 = arith.constant 0 : index
    %c0_3 = arith.constant 0 : index
    %2 = vector.load %arg4[%c0_2, %c0_3] : memref<1024x128xbf16, #tpu.memory_space<vmem>>, vector<1024x128xbf16>
    %cst = arith.constant dense<0.000000e+00> : vector<128x128xf32>
    %3 = tpu.matmul %1, %2, %cst {dimension_numbers = #tpu.dot_dimension_numbers<[1], [0], [0], [1], [0, 0, 1, 1], [], []>} : vector<128x1024xbf16>, vector<1024x128xbf16>, vector<128x128xf32> -> vector<128x128xf32>
    %c0_4 = arith.constant 0 : index
    %c0_5 = arith.constant 0 : index
    %4 = vector.load %arg6[%c0_4, %c0_5] : memref<128x128xbf16, #tpu.memory_space<vmem>>, vector<128x128xbf16>
    %c0_6 = arith.constant 0 : index
    %c0_7 = arith.constant 0 : index
    %5 = vector.load %arg5[%c0_6, %c0_7] : memref<1x128xf32, #tpu.memory_space<vmem>>, vector<1x128xf32>
    %c0_8 = arith.constant 0 : index
    %c0_9 = arith.constant 0 : index
    %6 = vector.load %arg7[%c0_8, %c0_9] : memref<1x128xf32, #tpu.memory_space<vmem>>, vector<1x128xf32>
    %7 = tpu.iota {dimensions = array<i32: 0>} : vector<128x128xi32>
    %8 = tpu.iota {dimensions = array<i32: 1>} : vector<128x128xi32>
    %9 = arith.cmpi eq, %7, %8 : vector<128x128xi32>
    %10 = arith.extui %9 : vector<128x128xi1> to vector<128x128xi32>
    %11 = arith.sitofp %10 : vector<128x128xi32> to vector<128x128xf32>
    %c0_10 = arith.constant 0 : index
    %c0_11 = arith.constant 0 : index
    %c0_12 = arith.constant 0 : index
    %12 = vector.load %arg1[%c0_10, %c0_11, %c0_12] : memref<1x128x128xbf16, #tpu.memory_space<vmem>>, vector<1x128x128xbf16>
    %13 = vector.shape_cast %12 : vector<1x128x128xbf16> to vector<128x128xbf16>
    %14 = arith.extf %13 : vector<128x128xbf16> to vector<128x128xf32>
    %c0_13 = arith.constant 0 : index
    %c0_14 = arith.constant 0 : index
    %c0_15 = arith.constant 0 : index
    %15 = vector.load %arg2[%c0_13, %c0_14, %c0_15] : memref<1x128x128xbf16, #tpu.memory_space<vmem>>, vector<1x128x128xbf16>
    %16 = vector.shape_cast %15 : vector<1x128x128xbf16> to vector<128x128xbf16>
    %17 = arith.extf %16 : vector<128x128xbf16> to vector<128x128xf32>
    %cst_16 = arith.constant dense<0.000000e+00> : vector<128x128xf32>
    %18 = tpu.matmul %13, %13, %cst_16 {dimension_numbers = #tpu.dot_dimension_numbers<[1], [1], [0], [0], [0, 0, 1, 0], [], []>} : vector<128x128xbf16>, vector<128x128xbf16>, vector<128x128xf32> -> vector<128x128xf32>
    %cst_17 = arith.constant 0.000000e+00 : f32
    %19 = vector.broadcast %cst_17 : f32 to vector<128x128xf32>
    %20 = arith.maximumf %18, %19 : vector<128x128xf32>
    %21 = arith.mulf %14, %14 : vector<128x128xf32>
    %cst_18 = arith.constant dense<0.000000e+00> : vector<128xf32>
    %22 = vector.multi_reduction <add>, %21, %cst_18 [1] : vector<128x128xf32> to vector<128xf32>
    %23 = vector.shape_cast %22 : vector<128xf32> to vector<128x1xf32>
    %24 = vector.shape_cast %23 : vector<128x1xf32> to vector<1x128x1xf32>
    %cst_19 = arith.constant dense<0.000000e+00> : vector<1xf32>
    %25 = vector.multi_reduction <add>, %24, %cst_19 [1, 2] : vector<1x128x1xf32> to vector<1xf32>
    %26 = vector.shape_cast %25 : vector<1xf32> to vector<1x1x1xf32>
    %27 = vector.extract %26[0, 0, 0] : f32 from vector<1x1x1xf32>
    %cst_20 = arith.constant 1.280000e+02 : f32
    %28 = arith.divf %27, %cst_20 : f32
    %cst_21 = arith.constant 9.99999997E-7 : f32
    %29 = arith.addf %28, %cst_21 : f32
    %cst_22 = arith.constant 1.000000e+00 : f32
    %30 = arith.divf %cst_22, %29 : f32
    %cst_23 = arith.constant 1.000000e+00 : f32
    %31 = arith.addf %cst_23, %30 : f32
    %32 = math.sqrt %31 : f32
    %33 = vector.broadcast %32 : f32 to vector<128x1xf32>
    %34 = arith.mulf %33, %23 : vector<128x1xf32>
    %cst_24 = arith.constant 1.000000e+00 : f32
    %35 = vector.broadcast %cst_24 : f32 to vector<128x1xf32>
    %36 = arith.addf %34, %35 : vector<128x1xf32>
    %37 = vector.broadcast %36 : vector<128x1xf32> to vector<128x128xf32>
    %38 = arith.mulf %11, %37 : vector<128x128xf32>
    %39 = arith.addf %20, %38 : vector<128x128xf32>
    %cst_25 = arith.constant dense<0.000000e+00> : vector<128xf32>
    %40 = vector.multi_reduction <add>, %39, %cst_25 [1] : vector<128x128xf32> to vector<128xf32>
    %41 = vector.shape_cast %40 : vector<128xf32> to vector<128x1xf32>
    %42 = math.rsqrt %41 : vector<128x1xf32>
    %43 = arith.truncf %39 : vector<128x128xf32> to vector<128x128xbf16>
    %44 = vector.broadcast %42 : vector<128x1xf32> to vector<128x128xf32>
    %45 = arith.mulf %44, %3 : vector<128x128xf32>
    %46 = arith.truncf %45 : vector<128x128xf32> to vector<128x128xbf16>
    %cst_26 = arith.constant dense<0.000000e+00> : vector<128x128xf32>
    %47 = tpu.matmul %43, %46, %cst_26 {dimension_numbers = #tpu.dot_dimension_numbers<[1], [0], [0], [1], [0, 0, 1, 1], [], []>} : vector<128x128xbf16>, vector<128x128xbf16>, vector<128x128xf32> -> vector<128x128xf32>
    %48 = vector.broadcast %42 : vector<128x1xf32> to vector<128x128xf32>
    %49 = arith.mulf %48, %47 : vector<128x128xf32>
    %50 = vector.broadcast %5 : vector<1x128xf32> to vector<128x128xf32>
    %51 = arith.addf %49, %50 : vector<128x128xf32>
    %cst_27 = arith.constant 0.000000e+00 : f32
    %52 = vector.broadcast %cst_27 : f32 to vector<128x128xf32>
    %53 = arith.maximumf %51, %52 : vector<128x128xf32>
    %54 = vector.broadcast %42 : vector<128x1xf32> to vector<128x128xf32>
    %55 = arith.mulf %54, %53 : vector<128x128xf32>
    %56 = arith.truncf %55 : vector<128x128xf32> to vector<128x128xbf16>
    %cst_28 = arith.constant dense<0.000000e+00> : vector<128x128xf32>
    %57 = tpu.matmul %43, %56, %cst_28 {dimension_numbers = #tpu.dot_dimension_numbers<[1], [0], [0], [1], [0, 0, 1, 1], [], []>} : vector<128x128xbf16>, vector<128x128xbf16>, vector<128x128xf32> -> vector<128x128xf32>
    %58 = vector.broadcast %42 : vector<128x1xf32> to vector<128x128xf32>
    %59 = arith.mulf %58, %57 : vector<128x128xf32>
    %60 = arith.truncf %59 : vector<128x128xf32> to vector<128x128xbf16>
    %cst_29 = arith.constant dense<0.000000e+00> : vector<128x128xf32>
    %61 = tpu.matmul %60, %4, %cst_29 {dimension_numbers = #tpu.dot_dimension_numbers<[1], [0], [0], [1], [0, 0, 1, 1], [], []>} : vector<128x128xbf16>, vector<128x128xbf16>, vector<128x128xf32> -> vector<128x128xf32>
    %62 = vector.broadcast %32 : f32 to vector<128x128xf32>
    %63 = arith.mulf %62, %14 : vector<128x128xf32>
    %cst_30 = arith.constant 1.000000e+00 : f32
    %64 = vector.broadcast %cst_30 : f32 to vector<128x128xf32>
    %65 = arith.subf %64, %17 : vector<128x128xf32>
    %66 = arith.mulf %63, %65 : vector<128x128xf32>
    %67 = vector.broadcast %6 : vector<1x128xf32> to vector<128x128xf32>
    %68 = arith.addf %61, %67 : vector<128x128xf32>
    %69 = arith.addf %68, %66 : vector<128x128xf32>
    %c0_31 = arith.constant 0 : index
    %c0_32 = arith.constant 0 : index
    %c0_33 = arith.constant 0 : index
    %70 = vector.load %arg8[%c0_31, %c0_32, %c0_33] : memref<1x128x128xf32, #tpu.memory_space<vmem>>, vector<1x128x128xf32>
    %71 = vector.shape_cast %70 : vector<1x128x128xf32> to vector<128x128xf32>
    %72 = vector.shape_cast %69 : vector<128x128xf32> to vector<1x128x128xf32>
    tpu.vector_store %arg8[%c0_31, %c0_32, %c0_33], %72 {strides = array<i32>} : memref<1x128x128xf32, #tpu.memory_space<vmem>>, vector<1x128x128xf32>,
    return
  }
  func.func @transform_0(%arg0: i32) -> (i32, i32, i32) {
    %c0_i32 = arith.constant 0 : i32
    %c0_i32_0 = arith.constant 0 : i32
    %c0_i32_1 = arith.constant 0 : i32
    return %arg0, %c0_i32, %c0_i32_0 : i32, i32, i32
  }
  func.func @transform_1(%arg0: i32) -> (i32, i32, i32) {
    %c0_i32 = arith.constant 0 : i32
    %c0_i32_0 = arith.constant 0 : i32
    %c0_i32_1 = arith.constant 0 : i32
    return %arg0, %c0_i32, %c0_i32_0 : i32, i32, i32
  }
  func.func @transform_2(%arg0: i32) -> (i32, i32, i32) {
    %c0_i32 = arith.constant 0 : i32
    %c0_i32_0 = arith.constant 0 : i32
    %c0_i32_1 = arith.constant 0 : i32
    return %arg0, %c0_i32, %c0_i32_0 : i32, i32, i32
  }
  func.func @transform_3(%arg0: i32) -> (i32, i32) {
    %c0_i32 = arith.constant 0 : i32
    %c0_i32_0 = arith.constant 0 : i32
    %c0_i32_1 = arith.constant 0 : i32
    return %c0_i32, %c0_i32_0 : i32, i32
  }
  func.func @transform_4(%arg0: i32) -> (i32, i32) {
    %c0_i32 = arith.constant 0 : i32
    %c0_i32_0 = arith.constant 0 : i32
    %c0_i32_1 = arith.constant 0 : i32
    return %c0_i32, %c0_i32_0 : i32, i32
  }
  func.func @transform_5(%arg0: i32) -> (i32, i32) {
    %c0_i32 = arith.constant 0 : i32
    %c0_i32_0 = arith.constant 0 : i32
    %c0_i32_1 = arith.constant 0 : i32
    return %c0_i32, %c0_i32_0 : i32, i32
  }
  func.func @transform_6(%arg0: i32) -> (i32, i32) {
    %c0_i32 = arith.constant 0 : i32
    %c0_i32_0 = arith.constant 0 : i32
    %c0_i32_1 = arith.constant 0 : i32
    return %c0_i32, %c0_i32_0 : i32, i32
  }
  func.func @transform_7(%arg0: i32) -> (i32, i32, i32) {
    %c0_i32 = arith.constant 0 : i32
    %c0_i32_0 = arith.constant 0 : i32
    %c0_i32_1 = arith.constant 0 : i32
    return %arg0, %c0_i32, %c0_i32_0 : i32, i32, i32
  }
}

</mosaic_0001>

<llo_original>
// kernel: segmentation_gnn_forward.1
$region0: #{segmentation_gnn_forward.1}
  #allocation0 [shape = 'u32[]', space=smem, size = 0x4, offset = 0x4, fixed_abs, tag = 'smem constant byte address 0x4 - core index']
  #allocation1 [shape = 'u32[144,128]{1,0:T(1,128)}', space=vmem, size = 0x12000, scoped, tag = 'internal scratch']
  %s0 = inlined_call_operand.vmem [shape: bf16[2,128,128], index: 0, kind: input, shape index: {}]
  %s1 = inlined_call_operand.vmem [shape: bf16[2,128,128], index: 1, kind: input, shape index: {}]
  %s2 = inlined_call_operand.vmem [shape: bf16[2,128,1024], index: 2, kind: input, shape index: {}]
  %s3 = inlined_call_operand.vmem [shape: bf16[1024,128], index: 3, kind: input, shape index: {}]
  %s4 = inlined_call_operand.vmem [shape: f32[1,128], index: 4, kind: input, shape index: {}]
  %s5 = inlined_call_operand.vmem [shape: bf16[128,128], index: 5, kind: input, shape index: {}]
  %s6 = inlined_call_operand.vmem [shape: f32[1,128], index: 6, kind: input, shape index: {}]
  %s7 = inlined_call_operand.vmem [shape: f32[2,128,128], index: 7, kind: output, shape index: {}]
  %s8 = sld [smem:[#allocation0]]
  $region61: #{segmentation_gnn_forward.1} parent=0
    _
  %s10 = ssub.s32 1, %s8
  %s11 = scalar_select 0, %s10, %s8
  loop: start=0, step=1, limit=4
  $region2: #{segmentation_gnn_forward.1} parent=0 // loop_pre_header
    _
  $region3: #{segmentation_gnn_forward.1} parent=0 // loop_header
    %s13 = sphi 0, %s17
    %p14 = scmp.ge.s32.totalorder %s13, 4
    %s23 = sphi 0, %s25
    %s26 = sphi 0, %s23
    %s27 = sphi 0, %s26
    %s43 = sphi 0, %s27
    %s49 = sphi 0, %s51
    %s52 = sphi 0, %s49
    %s53 = sphi 0, %s52
    %s69 = sphi 0, %s53
    %s75 = sphi 0, %s77
    %s78 = sphi 0, %s75
    %s79 = sphi 0, %s78
    %s95 = sphi 0, %s79
    %s99 = sphi 0, %s99
    %s101 = sphi 0, %s99
    %s102 = sphi 0, %s101
    %s116 = sphi 0, %s102
    %s120 = sphi 0, %s120
    %s122 = sphi 0, %s120
    %s123 = sphi 0, %s122
    %s137 = sphi 0, %s123
    %s141 = sphi 0, %s141
    %s143 = sphi 0, %s141
    %s144 = sphi 0, %s143
    %s158 = sphi 0, %s144
    %s162 = sphi 0, %s162
    %s164 = sphi 0, %s162
    %s165 = sphi 0, %s164
    %s179 = sphi 0, %s165
    %s185 = sphi 0, %s187
    %s188 = sphi 0, %s185
    %s189 = sphi 0, %s188
    %s205 = sphi 0, %s189
  $region4: #{segmentation_gnn_forward.1} parent=0 // loop_header_branch
    %16 = sbr.rel (%p14) target = $region8
  $region5: #{segmentation_gnn_forward.1} parent=0 // loop_body
    %s18 = ssub.s32 %s13, 1
    %s19 = ssub.s32 %s13, 2
    %s20 = sadd.s32 %s13, 1
    %s21 = ssub.s32 %s13, %s20
    %p22 = scmp.eq.s32.totalorder %s21, 0
    %s24 = sadd.s32 %s23, 1
    %s25 = scalar_select %p22, %s23, %s24
    %p28 = pneg %p22
    %p29 = scmp.eq.s32.totalorder %s13, 1
    %p30 = por %p28, %p29
    %p31 = scmp.ne.s32.totalorder %s23, %s26
    %p32 = scmp.eq.s32.totalorder %s13, 0
    %p33 = por %p31, %p32
    %p34 = scmp.ne.s32.totalorder %s23, %s26
    %p35 = scmp.eq.s32.totalorder %s18, 1
    %p36 = por %p34, %p35
    %p37 = scmp.ne.s32.totalorder %s26, %s27
    %p38 = scmp.eq.s32.totalorder %s18, 0
    %p39 = por %p37, %p38
    %p40 = scmp.ne.s32.totalorder %s26, %s27
    %p41 = scmp.eq.s32.totalorder %s19, 1
    %p42 = por %p40, %p41
    %p44 = scmp.ne.s32.totalorder %s27, %s43
    %p45 = scmp.eq.s32.totalorder %s19, 0
    %p46 = por %p44, %p45
    %s47 = ssub.s32 %s13, %s20
    %p48 = scmp.eq.s32.totalorder %s47, 0
    %s50 = sadd.s32 %s49, 1
    %s51 = scalar_select %p48, %s49, %s50
    %p54 = pneg %p48
    %p55 = scmp.eq.s32.totalorder %s13, 1
    %p56 = por %p54, %p55
    %p57 = scmp.ne.s32.totalorder %s49, %s52
    %p58 = scmp.eq.s32.totalorder %s13, 0
    %p59 = por %p57, %p58
    %p60 = scmp.ne.s32.totalorder %s49, %s52
    %p61 = scmp.eq.s32.totalorder %s18, 1
    %p62 = por %p60, %p61
    %p63 = scmp.ne.s32.totalorder %s52, %s53
    %p64 = scmp.eq.s32.totalorder %s18, 0
    %p65 = por %p63, %p64
    %p66 = scmp.ne.s32.totalorder %s52, %s53
    %p67 = scmp.eq.s32.totalorder %s19, 1
    %p68 = por %p66, %p67
    %p70 = scmp.ne.s32.totalorder %s53, %s69
    %p71 = scmp.eq.s32.totalorder %s19, 0
    %p72 = por %p70, %p71
    %s73 = ssub.s32 %s13, %s20
    %p74 = scmp.eq.s32.totalorder %s73, 0
    %s76 = sadd.s32 %s75, 1
    %s77 = scalar_select %p74, %s75, %s76
    %p80 = pneg %p74
    %p81 = scmp.eq.s32.totalorder %s13, 1
    %p82 = por %p80, %p81
    %p83 = scmp.ne.s32.totalorder %s75, %s78
    %p84 = scmp.eq.s32.totalorder %s13, 0
    %p85 = por %p83, %p84
    %p86 = scmp.ne.s32.totalorder %s75, %s78
    %p87 = scmp.eq.s32.totalorder %s18, 1
    %p88 = por %p86, %p87
    %p89 = scmp.ne.s32.totalorder %s78, %s79
    %p90 = scmp.eq.s32.totalorder %s18, 0
    %p91 = por %p89, %p90
    %p92 = scmp.ne.s32.totalorder %s78, %s79
    %p93 = scmp.eq.s32.totalorder %s19, 1
    %p94 = por %p92, %p93
    %p96 = scmp.ne.s32.totalorder %s79, %s95
    %p97 = scmp.eq.s32.totalorder %s19, 0
    %p98 = por %p96, %p97
    %s100 = sadd.s32 %s99, 1
    %p103 = scmp.eq.s32.totalorder %s13, 1
    %p104 = scmp.ne.s32.totalorder %s99, %s101
    %p105 = scmp.eq.s32.totalorder %s13, 0
    %p106 = por %p104, %p105
    %p107 = scmp.ne.s32.totalorder %s99, %s101
    %p108 = scmp.eq.s32.totalorder %s18, 1
    %p109 = por %p107, %p108
    %p110 = scmp.ne.s32.totalorder %s101, %s102
    %p111 = scmp.eq.s32.totalorder %s18, 0
    %p112 = por %p110, %p111
    %p113 = scmp.ne.s32.totalorder %s101, %s102
    %p114 = scmp.eq.s32.totalorder %s19, 1
    %p115 = por %p113, %p114
    %p117 = scmp.ne.s32.totalorder %s102, %s116
    %p118 = scmp.eq.s32.totalorder %s19, 0
    %p119 = por %p117, %p118
    %s121 = sadd.s32 %s120, 1
    %p124 = scmp.eq.s32.totalorder %s13, 1
    %p125 = scmp.ne.s32.totalorder %s120, %s122
    %p126 = scmp.eq.s32.totalorder %s13, 0
    %p127 = por %p125, %p126
    %p128 = scmp.ne.s32.totalorder %s120, %s122
    %p129 = scmp.eq.s32.totalorder %s18, 1
    %p130 = por %p128, %p129
    %p131 = scmp.ne.s32.totalorder %s122, %s123
    %p132 = scmp.eq.s32.totalorder %s18, 0
    %p133 = por %p131, %p132
    %p134 = scmp.ne.s32.totalorder %s122, %s123
    %p135 = scmp.eq.s32.totalorder %s19, 1
    %p136 = por %p134, %p135
    %p138 = scmp.ne.s32.totalorder %s123, %s137
    %p139 = scmp.eq.s32.totalorder %s19, 0
    %p140 = por %p138, %p139
    %s142 = sadd.s32 %s141, 1
    %p145 = scmp.eq.s32.totalorder %s13, 1
    %p146 = scmp.ne.s32.totalorder %s141, %s143
    %p147 = scmp.eq.s32.totalorder %s13, 0
    %p148 = por %p146, %p147
    %p149 = scmp.ne.s32.totalorder %s141, %s143
    %p150 = scmp.eq.s32.totalorder %s18, 1
    %p151 = por %p149, %p150
    %p152 = scmp.ne.s32.totalorder %s143, %s144
    %p153 = scmp.eq.s32.totalorder %s18, 0
    %p154 = por %p152, %p153
    %p155 = scmp.ne.s32.totalorder %s143, %s144
    %p156 = scmp.eq.s32.totalorder %s19, 1
    %p157 = por %p155, %p156
    %p159 = scmp.ne.s32.totalorder %s144, %s158
    %p160 = scmp.eq.s32.totalorder %s19, 0
    %p161 = por %p159, %p160
    %s163 = sadd.s32 %s162, 1
    %p166 = scmp.eq.s32.totalorder %s13, 1
    %p167 = scmp.ne.s32.totalorder %s162, %s164
    %p168 = scmp.eq.s32.totalorder %s13, 0
    %p169 = por %p167, %p168
    %p170 = scmp.ne.s32.totalorder %s162, %s164
    %p171 = scmp.eq.s32.totalorder %s18, 1
    %p172 = por %p170, %p171
    %p173 = scmp.ne.s32.totalorder %s164, %s165
    %p174 = scmp.eq.s32.totalorder %s18, 0
    %p175 = por %p173, %p174
    %p176 = scmp.ne.s32.totalorder %s164, %s165
    %p177 = scmp.eq.s32.totalorder %s19, 1
    %p178 = por %p176, %p177
    %p180 = scmp.ne.s32.totalorder %s165, %s179
    %p181 = scmp.eq.s32.totalorder %s19, 0
    %p182 = por %p180, %p181
    %s183 = ssub.s32 %s13, %s20
    %p184 = scmp.eq.s32.totalorder %s183, 0
    %s186 = sadd.s32 %s185, 1
    %s187 = scalar_select %p184, %s185, %s186
    %p190 = pneg %p184
    %p191 = scmp.eq.s32.totalorder %s13, 1
    %p192 = por %p190, %p191
    %p193 = scmp.ne.s32.totalorder %s185, %s188
    %p194 = scmp.eq.s32.totalorder %s13, 0
    %p195 = por %p193, %p194
    %p196 = scmp.ne.s32.totalorder %s185, %s188
    %p197 = scmp.eq.s32.totalorder %s18, 1
    %p198 = por %p196, %p197
    %p199 = scmp.ne.s32.totalorder %s188, %s189
    %p200 = scmp.eq.s32.totalorder %s18, 0
    %p201 = por %p199, %p200
    %p202 = scmp.ne.s32.totalorder %s188, %s189
    %p203 = scmp.eq.s32.totalorder %s19, 1
    %p204 = por %p202, %p203
    %p206 = scmp.ne.s32.totalorder %s189, %s205
    %p207 = scmp.eq.s32.totalorder %s19, 0
    %p208 = por %p206, %p207
    %p209 = scmp.le.s32.totalorder 1, %s13
    %p210 = scmp.lt.s32.totalorder %s13, 3
    %p211 = pnand %p209, %p210
    %p212 = pneg %p211
    // Predicated region
    $region9: #{segmentation_gnn_forward.1} parent=5 // pred_check
      _
    $region10: #{segmentation_gnn_forward.1} parent=5 // pred_check_branch
      %214 = sbr.rel (%p211) target = $region12
    $region11: #{segmentation_gnn_forward.1} parent=5 // pred_region
      %s215 = ssub.s32 %s13, 1
      // Predicated region
      $region13: #{segmentation_gnn_forward.1} parent=11 // pred_check
        %p216 = pneg %p112
      $region14: #{segmentation_gnn_forward.1} parent=11 // pred_check_branch
        %218 = sbr.rel (%p216) target = $region16
      $region15: #{segmentation_gnn_forward.1} parent=11 // pred_region
        _
      $region16: #{segmentation_gnn_forward.1} parent=11 // pred_fallthru
        _
      // Predicated region
      $region17: #{segmentation_gnn_forward.1} parent=11 // pred_check
        %p219 = pneg %p133
      $region18: #{segmentation_gnn_forward.1} parent=11 // pred_check_branch
        %221 = sbr.rel (%p219) target = $region20
      $region19: #{segmentation_gnn_forward.1} parent=11 // pred_region
        _
      $region20: #{segmentation_gnn_forward.1} parent=11 // pred_fallthru
        _
      // Predicated region
      $region21: #{segmentation_gnn_forward.1} parent=11 // pred_check
        %p222 = pneg %p154
      $region22: #{segmentation_gnn_forward.1} parent=11 // pred_check_branch
        %224 = sbr.rel (%p222) target = $region24
      $region23: #{segmentation_gnn_forward.1} parent=11 // pred_region
        _
      $region24: #{segmentation_gnn_forward.1} parent=11 // pred_fallthru
        _
      // Predicated region
      $region25: #{segmentation_gnn_forward.1} parent=11 // pred_check
        %p225 = pneg %p175
      $region26: #{segmentation_gnn_forward.1} parent=11 // pred_check_branch
        %227 = sbr.rel (%p225) target = $region28
      $region27: #{segmentation_gnn_forward.1} parent=11 // pred_region
        _
      $region28: #{segmentation_gnn_forward.1} parent=11 // pred_fallthru
        _
    $region12: #{segmentation_gnn_forward.1} parent=5 // pred_fallthru
      _
    %p228 = scmp.lt.s32.totalorder %s13, 2
    // Predicated region
    $region29: #{segmentation_gnn_forward.1} parent=5 // pred_check
      %p229 = pneg %p228
    $region30: #{segmentation_gnn_forward.1} parent=5 // pred_check_branch
      %231 = sbr.rel (%p229) target = $region32
    $region31: #{segmentation_gnn_forward.1} parent=5 // pred_region
      // Predicated region
      $region33: #{segmentation_gnn_forward.1} parent=31 // pred_check
        %p232 = pneg %p33
      $region34: #{segmentation_gnn_forward.1} parent=31 // pred_check_branch
        %234 = sbr.rel (%p232) target = $region36
      $region35: #{segmentation_gnn_forward.1} parent=31 // pred_region
        %p235 = scmp.lt.s32.totalorder %s13, 1
        %s236 = scalar_select %p235, %s13, 1
        %s237 = smul.addr %s236, 16
        %s238 = smul.addr %s237, 4
        %s239 = scalar_lea.vmem %s0, %s238
      $region36: #{segmentation_gnn_forward.1} parent=31 // pred_fallthru
        _
      // Predicated region
      $region37: #{segmentation_gnn_forward.1} parent=31 // pred_check
        %p240 = pneg %p59
      $region38: #{segmentation_gnn_forward.1} parent=31 // pred_check_branch
        %242 = sbr.rel (%p240) target = $region40
      $region39: #{segmentation_gnn_forward.1} parent=31 // pred_region
        %p243 = scmp.lt.s32.totalorder %s13, 1
        %s244 = scalar_select %p243, %s13, 1
        %s245 = smul.addr %s244, 16
        %s246 = smul.addr %s245, 4
        %s247 = scalar_lea.vmem %s1, %s246
      $region40: #{segmentation_gnn_forward.1} parent=31 // pred_fallthru
        _
      // Predicated region
      $region41: #{segmentation_gnn_forward.1} parent=31 // pred_check
        %p248 = pneg %p85
      $region42: #{segmentation_gnn_forward.1} parent=31 // pred_check_branch
        %250 = sbr.rel (%p248) target = $region44
      $region43: #{segmentation_gnn_forward.1} parent=31 // pred_region
        %p251 = scmp.lt.s32.totalorder %s13, 1
        %s252 = scalar_select %p251, %s13, 1
        %s253 = smul.addr %s252, 128
        %s254 = smul.addr %s253, 4
        %s255 = scalar_lea.vmem %s2, %s254
      $region44: #{segmentation_gnn_forward.1} parent=31 // pred_fallthru
        _
    $region32: #{segmentation_gnn_forward.1} parent=5 // pred_fallthru
      _
    %p256 = scmp.le.s32.totalorder 1, %s13
    %p257 = scmp.lt.s32.totalorder %s13, 3
    %p258 = pnand %p256, %p257
    %p259 = pneg %p258
    // Predicated region
    $region45: #{segmentation_gnn_forward.1} parent=5 // pred_check
      _
    $region46: #{segmentation_gnn_forward.1} parent=5 // pred_check_branch
      %261 = sbr.rel (%p258) target = $region48
    $region47: #{segmentation_gnn_forward.1} parent=5 // pred_region
      %s262 = ssub.s32 %s13, 1
      %p263 = scmp.lt.s32.totalorder %s18, 1
      %s264 = scalar_select %p263, %s18, 1
      %s265 = smul.addr %s264, 16
      %s266 = smul.addr %s265, 4
      %s267 = scalar_lea.vmem %s0, %s266
      %p268 = pneg %p39
      %p269 = pneg %p36
      %p270 = scmp.lt.s32.totalorder %s18, 1
      %s271 = scalar_select %p270, %s18, 1
      %s272 = smul.addr %s271, 16
      %s273 = smul.addr %s272, 4
      %s274 = scalar_lea.vmem %s1, %s273
      %p275 = pneg %p65
      %p276 = pneg %p62
      %p277 = scmp.lt.s32.totalorder %s18, 1
      %s278 = scalar_select %p277, %s18, 1
      %s279 = smul.addr %s278, 128
      %s280 = smul.addr %s279, 4
      %s281 = scalar_lea.vmem %s2, %s280
      %p282 = pneg %p91
      %p283 = pneg %p88
      %p284 = pneg %p112
      %p285 = pneg %p109
      %p286 = pneg %p133
      %p287 = pneg %p130
      %p288 = pneg %p154
      %p289 = pneg %p151
      %p290 = pneg %p175
      %p291 = pneg %p172
      %p292 = pneg %p201
      %p293 = pneg %p198
      %p294 = scmp.lt.s32.totalorder %s18, 1
      %s295 = scalar_select %p294, %s18, 1
      %s296 = smul.addr %s295, 16
      %s297 = smul.addr %s296, 8
      %s298 = scalar_lea.vmem %s7, %s297
      %p299 = scmp.lt.s32.totalorder %s18, 1
      %s300 = scalar_select %p299, %s18, 1
      %s301 = smul.addr %s300, 16
      %s302 = smul.addr %s301, 4
      %s303 = scalar_lea.vmem %s0, %s302
      %p304 = scmp.lt.s32.totalorder %s18, 1
      %s305 = scalar_select %p304, %s18, 1
      %s306 = smul.addr %s305, 16
      %s307 = smul.addr %s306, 4
      %s308 = scalar_lea.vmem %s1, %s307
      %p309 = scmp.lt.s32.totalorder %s18, 1
      %s310 = scalar_select %p309, %s18, 1
      %s311 = smul.addr %s310, 128
      %s312 = smul.addr %s311, 4
      %s313 = scalar_lea.vmem %s2, %s312
      %p314 = scmp.lt.s32.totalorder %s18, 1
      %s315 = scalar_select %p314, %s18, 1
      %s316 = smul.addr %s315, 16
      %s317 = smul.addr %s316, 8
      %s318 = scalar_lea.vmem %s7, %s317
      %v320 = vld [vmem:[%s313] sm:$0xff]
      %v321 = vld [vmem:[%s313 + $0x8] sm:$0xff]
      %v322 = vld [vmem:[%s313 + $0x10] sm:$0xff]
      %v323 = vld [vmem:[%s313 + $0x18] sm:$0xff]
      %v324 = vld [vmem:[%s313 + $0x20] sm:$0xff]
      %v325 = vld [vmem:[%s313 + $0x28] sm:$0xff]
      %v326 = vld [vmem:[%s313 + $0x30] sm:$0xff]
      %v327 = vld [vmem:[%s313 + $0x38] sm:$0xff]
      %v328 = vld [vmem:[%s313 + $0x40] sm:$0xff]
      %v329 = vld [vmem:[%s313 + $0x48] sm:$0xff]
      %v330 = vld [vmem:[%s313 + $0x50] sm:$0xff]
      %v331 = vld [vmem:[%s313 + $0x58] sm:$0xff]
      %v332 = vld [vmem:[%s313 + $0x60] sm:$0xff]
      %v333 = vld [vmem:[%s313 + $0x68] sm:$0xff]
      %v334 = vld [vmem:[%s313 + $0x70] sm:$0xff]
      %v335 = vld [vmem:[%s313 + $0x78] sm:$0xff]
      %v336 = vld [vmem:[%s313 + $0x80] sm:$0xff]
      %v337 = vld [vmem:[%s313 + $0x88] sm:$0xff]
      %v338 = vld [vmem:[%s313 + $0x90] sm:$0xff]
      %v339 = vld [vmem:[%s313 + $0x98] sm:$0xff]
      %v340 = vld [vmem:[%s313 + $0xa0] sm:$0xff]
      %v341 = vld [vmem:[%s313 + $0xa8] sm:$0xff]
      %v342 = vld [vmem:[%s313 + $0xb0] sm:$0xff]
      %v343 = vld [vmem:[%s313 + $0xb8] sm:$0xff]
      %v344 = vld [vmem:[%s313 + $0xc0] sm:$0xff]
      %v345 = vld [vmem:[%s313 + $0xc8] sm:$0xff]
      %v346 = vld [vmem:[%s313 + $0xd0] sm:$0xff]
      %v347 = vld [vmem:[%s313 + $0xd8] sm:$0xff]
      %v348 = vld [vmem:[%s313 + $0xe0] sm:$0xff]
      %v349 = vld [vmem:[%s313 + $0xe8] sm:$0xff]
      %v350 = vld [vmem:[%s313 + $0xf0] sm:$0xff]
      %v351 = vld [vmem:[%s313 + $0xf8] sm:$0xff]
      %v352 = vld [vmem:[%s313 + $0x100] sm:$0xff]
      %v353 = vld [vmem:[%s313 + $0x108] sm:$0xff]
      %v354 = vld [vmem:[%s313 + $0x110] sm:$0xff]
      %v355 = vld [vmem:[%s313 + $0x118] sm:$0xff]
      %v356 = vld [vmem:[%s313 + $0x120] sm:$0xff]
      %v357 = vld [vmem:[%s313 + $0x128] sm:$0xff]
      %v358 = vld [vmem:[%s313 + $0x130] sm:$0xff]
      %v359 = vld [vmem:[%s313 + $0x138] sm:$0xff]
      %v360 = vld [vmem:[%s313 + $0x140] sm:$0xff]
      %v361 = vld [vmem:[%s313 + $0x148] sm:$0xff]
      %v362 = vld [vmem:[%s313 + $0x150] sm:$0xff]
      %v363 = vld [vmem:[%s313 + $0x158] sm:$0xff]
      %v364 = vld [vmem:[%s313 + $0x160] sm:$0xff]
      %v365 = vld [vmem:[%s313 + $0x168] sm:$0xff]
      %v366 = vld [vmem:[%s313 + $0x170] sm:$0xff]
      %v367 = vld [vmem:[%s313 + $0x178] sm:$0xff]
      %v368 = vld [vmem:[%s313 + $0x180] sm:$0xff]
      %v369 = vld [vmem:[%s313 + $0x188] sm:$0xff]
      %v370 = vld [vmem:[%s313 + $0x190] sm:$0xff]
      %v371 = vld [vmem:[%s313 + $0x198] sm:$0xff]
      %v372 = vld [vmem:[%s313 + $0x1a0] sm:$0xff]
      %v373 = vld [vmem:[%s313 + $0x1a8] sm:$0xff]
      %v374 = vld [vmem:[%s313 + $0x1b0] sm:$0xff]
      %v375 = vld [vmem:[%s313 + $0x1b8] sm:$0xff]
      %v376 = vld [vmem:[%s313 + $0x1c0] sm:$0xff]
      %v377 = vld [vmem:[%s313 + $0x1c8] sm:$0xff]
      %v378 = vld [vmem:[%s313 + $0x1d0] sm:$0xff]
      %v379 = vld [vmem:[%s313 + $0x1d8] sm:$0xff]
      %v380 = vld [vmem:[%s313 + $0x1e0] sm:$0xff]
      %v381 = vld [vmem:[%s313 + $0x1e8] sm:$0xff]
      %v382 = vld [vmem:[%s313 + $0x1f0] sm:$0xff]
      %v383 = vld [vmem:[%s313 + $0x1f8] sm:$0xff]
      %v384 = vld [vmem:[%s3] sm:$0xf]
      %v385 = vld [vmem:[%s3 + $0x4] sm:$0xf]
      %v386 = vld [vmem:[%s3 + $0x8] sm:$0xf]
      %v387 = vld [vmem:[%s3 + $0xc] sm:$0xf]
      %v388 = vld [vmem:[%s3 + $0x10] sm:$0xf]
      %v389 = vld [vmem:[%s3 + $0x14] sm:$0xf]
      %v390 = vld [vmem:[%s3 + $0x18] sm:$0xf]
      %v391 = vld [vmem:[%s3 + $0x1c] sm:$0xf]
      %v392 = vld [vmem:[%s3 + $0x20] sm:$0xf]
      %v393 = vld [vmem:[%s3 + $0x24] sm:$0xf]
      %v394 = vld [vmem:[%s3 + $0x28] sm:$0xf]
      %v395 = vld [vmem:[%s3 + $0x2c] sm:$0xf]
      %v396 = vld [vmem:[%s3 + $0x30] sm:$0xf]
      %v397 = vld [vmem:[%s3 + $0x34] sm:$0xf]
      %v398 = vld [vmem:[%s3 + $0x38] sm:$0xf]
      %v399 = vld [vmem:[%s3 + $0x3c] sm:$0xf]
      %v400 = vld [vmem:[%s3 + $0x40] sm:$0xf]
      %v401 = vld [vmem:[%s3 + $0x44] sm:$0xf]
      %v402 = vld [vmem:[%s3 + $0x48] sm:$0xf]
      %v403 = vld [vmem:[%s3 + $0x4c] sm:$0xf]
      %v404 = vld [vmem:[%s3 + $0x50] sm:$0xf]
      %v405 = vld [vmem:[%s3 + $0x54] sm:$0xf]
      %v406 = vld [vmem:[%s3 + $0x58] sm:$0xf]
      %v407 = vld [vmem:[%s3 + $0x5c] sm:$0xf]
      %v408 = vld [vmem:[%s3 + $0x60] sm:$0xf]
      %v409 = vld [vmem:[%s3 + $0x64] sm:$0xf]
      %v410 = vld [vmem:[%s3 + $0x68] sm:$0xf]
      %v411 = vld [vmem:[%s3 + $0x6c] sm:$0xf]
      %v412 = vld [vmem:[%s3 + $0x70] sm:$0xf]
      %v413 = vld [vmem:[%s3 + $0x74] sm:$0xf]
      %v414 = vld [vmem:[%s3 + $0x78] sm:$0xf]
      %v415 = vld [vmem:[%s3 + $0x7c] sm:$0xf]
      %v416 = vld [vmem:[%s3 + $0x80] sm:$0xf]
      %v417 = vld [vmem:[%s3 + $0x84] sm:$0xf]
      %v418 = vld [vmem:[%s3 + $0x88] sm:$0xf]
      %v419 = vld [vmem:[%s3 + $0x8c] sm:$0xf]
      %v420 = vld [vmem:[%s3 + $0x90] sm:$0xf]
      %v421 = vld [vmem:[%s3 + $0x94] sm:$0xf]
      %v422 = vld [vmem:[%s3 + $0x98] sm:$0xf]
      %v423 = vld [vmem:[%s3 + $0x9c] sm:$0xf]
      %v424 = vld [vmem:[%s3 + $0xa0] sm:$0xf]
      %v425 = vld [vmem:[%s3 + $0xa4] sm:$0xf]
      %v426 = vld [vmem:[%s3 + $0xa8] sm:$0xf]
      %v427 = vld [vmem:[%s3 + $0xac] sm:$0xf]
      %v428 = vld [vmem:[%s3 + $0xb0] sm:$0xf]
      %v429 = vld [vmem:[%s3 + $0xb4] sm:$0xf]
      %v430 = vld [vmem:[%s3 + $0xb8] sm:$0xf]
      %v431 = vld [vmem:[%s3 + $0xbc] sm:$0xf]
      %v432 = vld [vmem:[%s3 + $0xc0] sm:$0xf]
      %v433 = vld [vmem:[%s3 + $0xc4] sm:$0xf]
      %v434 = vld [vmem:[%s3 + $0xc8] sm:$0xf]
      %v435 = vld [vmem:[%s3 + $0xcc] sm:$0xf]
      %v436 = vld [vmem:[%s3 + $0xd0] sm:$0xf]
      %v437 = vld [vmem:[%s3 + $0xd4] sm:$0xf]
      %v438 = vld [vmem:[%s3 + $0xd8] sm:$0xf]
      %v439 = vld [vmem:[%s3 + $0xdc] sm:$0xf]
      %v440 = vld [vmem:[%s3 + $0xe0] sm:$0xf]
      %v441 = vld [vmem:[%s3 + $0xe4] sm:$0xf]
      %v442 = vld [vmem:[%s3 + $0xe8] sm:$0xf]
      %v443 = vld [vmem:[%s3 + $0xec] sm:$0xf]
      %v444 = vld [vmem:[%s3 + $0xf0] sm:$0xf]
      %v445 = vld [vmem:[%s3 + $0xf4] sm:$0xf]
      %v446 = vld [vmem:[%s3 + $0xf8] sm:$0xf]
      %v447 = vld [vmem:[%s3 + $0xfc] sm:$0xf]
      %v448 = vld [vmem:[%s3 + $0x100] sm:$0xf]
      %v449 = vld [vmem:[%s3 + $0x104] sm:$0xf]
      %v450 = vld [vmem:[%s3 + $0x108] sm:$0xf]
      %v451 = vld [vmem:[%s3 + $0x10c] sm:$0xf]
      %v452 = vld [vmem:[%s3 + $0x110] sm:$0xf]
      %v453 = vld [vmem:[%s3 + $0x114] sm:$0xf]
      %v454 = vld [vmem:[%s3 + $0x118] sm:$0xf]
      %v455 = vld [vmem:[%s3 + $0x11c] sm:$0xf]
      %v456 = vld [vmem:[%s3 + $0x120] sm:$0xf]
      %v457 = vld [vmem:[%s3 + $0x124] sm:$0xf]
      %v458 = vld [vmem:[%s3 + $0x128] sm:$0xf]
      %v459 = vld [vmem:[%s3 + $0x12c] sm:$0xf]
      %v460 = vld [vmem:[%s3 + $0x130] sm:$0xf]
      %v461 = vld [vmem:[%s3 + $0x134] sm:$0xf]
      %v462 = vld [vmem:[%s3 + $0x138] sm:$0xf]
      %v463 = vld [vmem:[%s3 + $0x13c] sm:$0xf]
      %v464 = vld [vmem:[%s3 + $0x140] sm:$0xf]
      %v465 = vld [vmem:[%s3 + $0x144] sm:$0xf]
      %v466 = vld [vmem:[%s3 + $0x148] sm:$0xf]
      %v467 = vld [vmem:[%s3 + $0x14c] sm:$0xf]
      %v468 = vld [vmem:[%s3 + $0x150] sm:$0xf]
      %v469 = vld [vmem:[%s3 + $0x154] sm:$0xf]
      %v470 = vld [vmem:[%s3 + $0x158] sm:$0xf]
      %v471 = vld [vmem:[%s3 + $0x15c] sm:$0xf]
      %v472 = vld [vmem:[%s3 + $0x160] sm:$0xf]
      %v473 = vld [vmem:[%s3 + $0x164] sm:$0xf]
      %v474 = vld [vmem:[%s3 + $0x168] sm:$0xf]
      %v475 = vld [vmem:[%s3 + $0x16c] sm:$0xf]
      %v476 = vld [vmem:[%s3 + $0x170] sm:$0xf]
      %v477 = vld [vmem:[%s3 + $0x174] sm:$0xf]
      %v478 = vld [vmem:[%s3 + $0x178] sm:$0xf]
      %v479 = vld [vmem:[%s3 + $0x17c] sm:$0xf]
      %v480 = vld [vmem:[%s3 + $0x180] sm:$0xf]
      %v481 = vld [vmem:[%s3 + $0x184] sm:$0xf]
      %v482 = vld [vmem:[%s3 + $0x188] sm:$0xf]
      %v483 = vld [vmem:[%s3 + $0x18c] sm:$0xf]
      %v484 = vld [vmem:[%s3 + $0x190] sm:$0xf]
      %v485 = vld [vmem:[%s3 + $0x194] sm:$0xf]
      %v486 = vld [vmem:[%s3 + $0x198] sm:$0xf]
      %v487 = vld [vmem:[%s3 + $0x19c] sm:$0xf]
      %v488 = vld [vmem:[%s3 + $0x1a0] sm:$0xf]
      %v489 = vld [vmem:[%s3 + $0x1a4] sm:$0xf]
      %v490 = vld [vmem:[%s3 + $0x1a8] sm:$0xf]
      %v491 = vld [vmem:[%s3 + $0x1ac] sm:$0xf]
      %v492 = vld [vmem:[%s3 + $0x1b0] sm:$0xf]
      %v493 = vld [vmem:[%s3 + $0x1b4] sm:$0xf]
      %v494 = vld [vmem:[%s3 + $0x1b8] sm:$0xf]
      %v495 = vld [vmem:[%s3 + $0x1bc] sm:$0xf]
      %v496 = vld [vmem:[%s3 + $0x1c0] sm:$0xf]
      %v497 = vld [vmem:[%s3 + $0x1c4] sm:$0xf]
      %v498 = vld [vmem:[%s3 + $0x1c8] sm:$0xf]
      %v499 = vld [vmem:[%s3 + $0x1cc] sm:$0xf]
      %v500 = vld [vmem:[%s3 + $0x1d0] sm:$0xf]
      %v501 = vld [vmem:[%s3 + $0x1d4] sm:$0xf]
      %v502 = vld [vmem:[%s3 + $0x1d8] sm:$0xf]
      %v503 = vld [vmem:[%s3 + $0x1dc] sm:$0xf]
      %v504 = vld [vmem:[%s3 + $0x1e0] sm:$0xf]
      %v505 = vld [vmem:[%s3 + $0x1e4] sm:$0xf]
      %v506 = vld [vmem:[%s3 + $0x1e8] sm:$0xf]
      %v507 = vld [vmem:[%s3 + $0x1ec] sm:$0xf]
      %v508 = vld [vmem:[%s3 + $0x1f0] sm:$0xf]
      %v509 = vld [vmem:[%s3 + $0x1f4] sm:$0xf]
      %v510 = vld [vmem:[%s3 + $0x1f8] sm:$0xf]
      %v511 = vld [vmem:[%s3 + $0x1fc] sm:$0xf]
      %v576 = vunpack.c.l.b16 %v320
      %v577 = vunpack.c.h.b16 %v320
      %v578 = vunpack.c.l.b16 %v321
      %v579 = vunpack.c.h.b16 %v321
      %v580 = vunpack.c.l.b16 %v322
      %v581 = vunpack.c.h.b16 %v322
      %v582 = vunpack.c.l.b16 %v323
      %v583 = vunpack.c.h.b16 %v323
      %v584 = vunpack.c.l.b16 %v324
      %v585 = vunpack.c.h.b16 %v324
      %v586 = vunpack.c.l.b16 %v325
      %v587 = vunpack.c.h.b16 %v325
      %v588 = vunpack.c.l.b16 %v326
      %v589 = vunpack.c.h.b16 %v326
      %v590 = vunpack.c.l.b16 %v327
      %v591 = vunpack.c.h.b16 %v327
      %v592 = vunpack.c.l.b16 %v328
      %v593 = vunpack.c.h.b16 %v328
      %v594 = vunpack.c.l.b16 %v329
      %v595 = vunpack.c.h.b16 %v329
      %v596 = vunpack.c.l.b16 %v330
      %v597 = vunpack.c.h.b16 %v330
      %v598 = vunpack.c.l.b16 %v331
      %v599 = vunpack.c.h.b16 %v331
      %v600 = vunpack.c.l.b16 %v332
      %v601 = vunpack.c.h.b16 %v332
      %v602 = vunpack.c.l.b16 %v333
      %v603 = vunpack.c.h.b16 %v333
      %v604 = vunpack.c.l.b16 %v334
      %v605 = vunpack.c.h.b16 %v334
      %v606 = vunpack.c.l.b16 %v335
      %v607 = vunpack.c.h.b16 %v335
      %v608 = vunpack.c.l.b16 %v336
      %v609 = vunpack.c.h.b16 %v336
      %v610 = vunpack.c.l.b16 %v337
      %v611 = vunpack.c.h.b16 %v337
      %v612 = vunpack.c.l.b16 %v338
      %v613 = vunpack.c.h.b16 %v338
      %v614 = vunpack.c.l.b16 %v339
      %v615 = vunpack.c.h.b16 %v339
      %v616 = vunpack.c.l.b16 %v340
      %v617 = vunpack.c.h.b16 %v340
      %v618 = vunpack.c.l.b16 %v341
      %v619 = vunpack.c.h.b16 %v341
      %v620 = vunpack.c.l.b16 %v342
      %v621 = vunpack.c.h.b16 %v342
      %v622 = vunpack.c.l.b16 %v343
      %v623 = vunpack.c.h.b16 %v343
      %v624 = vunpack.c.l.b16 %v344
      %v625 = vunpack.c.h.b16 %v344
      %v626 = vunpack.c.l.b16 %v345
      %v627 = vunpack.c.h.b16 %v345
      %v628 = vunpack.c.l.b16 %v346
      %v629 = vunpack.c.h.b16 %v346
      %v630 = vunpack.c.l.b16 %v347
      %v631 = vunpack.c.h.b16 %v347
      %v632 = vunpack.c.l.b16 %v348
      %v633 = vunpack.c.h.b16 %v348
      %v634 = vunpack.c.l.b16 %v349
      %v635 = vunpack.c.h.b16 %v349
      %v636 = vunpack.c.l.b16 %v350
      %v637 = vunpack.c.h.b16 %v350
      %v638 = vunpack.c.l.b16 %v351
      %v639 = vunpack.c.h.b16 %v351
      %v640 = vunpack.c.l.b16 %v352
      %v641 = vunpack.c.h.b16 %v352
      %v642 = vunpack.c.l.b16 %v353
      %v643 = vunpack.c.h.b16 %v353
      %v644 = vunpack.c.l.b16 %v354
      %v645 = vunpack.c.h.b16 %v354
      %v646 = vunpack.c.l.b16 %v355
      %v647 = vunpack.c.h.b16 %v355
      %v648 = vunpack.c.l.b16 %v356
      %v649 = vunpack.c.h.b16 %v356
      %v650 = vunpack.c.l.b16 %v357
      %v651 = vunpack.c.h.b16 %v357
      %v652 = vunpack.c.l.b16 %v358
      %v653 = vunpack.c.h.b16 %v358
      %v654 = vunpack.c.l.b16 %v359
      %v655 = vunpack.c.h.b16 %v359
      %v656 = vunpack.c.l.b16 %v360
      %v657 = vunpack.c.h.b16 %v360
      %v658 = vunpack.c.l.b16 %v361
      %v659 = vunpack.c.h.b16 %v361
      %v660 = vunpack.c.l.b16 %v362
      %v661 = vunpack.c.h.b16 %v362
      %v662 = vunpack.c.l.b16 %v363
      %v663 = vunpack.c.h.b16 %v363
      %v664 = vunpack.c.l.b16 %v364
      %v665 = vunpack.c.h.b16 %v364
      %v666 = vunpack.c.l.b16 %v365
      %v667 = vunpack.c.h.b16 %v365
      %v668 = vunpack.c.l.b16 %v366
      %v669 = vunpack.c.h.b16 %v366
      %v670 = vunpack.c.l.b16 %v367
      %v671 = vunpack.c.h.b16 %v367
      %v672 = vunpack.c.l.b16 %v368
      %v673 = vunpack.c.h.b16 %v368
      %v674 = vunpack.c.l.b16 %v369
      %v675 = vunpack.c.h.b16 %v369
      %v676 = vunpack.c.l.b16 %v370
      %v677 = vunpack.c.h.b16 %v370
      %v678 = vunpack.c.l.b16 %v371
      %v679 = vunpack.c.h.b16 %v371
      %v680 = vunpack.c.l.b16 %v372
      %v681 = vunpack.c.h.b16 %v372
      %v682 = vunpack.c.l.b16 %v373
      %v683 = vunpack.c.h.b16 %v373
      %v684 = vunpack.c.l.b16 %v374
      %v685 = vunpack.c.h.b16 %v374
      %v686 = vunpack.c.l.b16 %v375
      %v687 = vunpack.c.h.b16 %v375
      %v688 = vunpack.c.l.b16 %v376
      %v689 = vunpack.c.h.b16 %v376
      %v690 = vunpack.c.l.b16 %v377
      %v691 = vunpack.c.h.b16 %v377
      %v692 = vunpack.c.l.b16 %v378
      %v693 = vunpack.c.h.b16 %v378
      %v694 = vunpack.c.l.b16 %v379
      %v695 = vunpack.c.h.b16 %v379
      %v696 = vunpack.c.l.b16 %v380
      %v697 = vunpack.c.h.b16 %v380
      %v698 = vunpack.c.l.b16 %v381
      %v699 = vunpack.c.h.b16 %v381
      %v700 = vunpack.c.l.b16 %v382
      %v701 = vunpack.c.h.b16 %v382
      %v702 = vunpack.c.l.b16 %v383
      %v703 = vunpack.c.h.b16 %v383
      %v704 = vpack.c.b16 %v584, %v576
      %v705 = vpack.c.b16 %v585, %v577
      %v706 = vpack.c.b16 %v586, %v578
      %v707 = vpack.c.b16 %v587, %v579
      %v708 = vpack.c.b16 %v588, %v580
      %v709 = vpack.c.b16 %v589, %v581
      %v710 = vpack.c.b16 %v590, %v582
      %v711 = vpack.c.b16 %v591, %v583
      %v712 = vpack.c.b16 %v600, %v592
      %v713 = vpack.c.b16 %v601, %v593
      %v714 = vpack.c.b16 %v602, %v594
      %v715 = vpack.c.b16 %v603, %v595
      %v716 = vpack.c.b16 %v604, %v596
      %v717 = vpack.c.b16 %v605, %v597
      %v718 = vpack.c.b16 %v606, %v598
      %v719 = vpack.c.b16 %v607, %v599
      %v720 = vpack.c.b16 %v616, %v608
      %v721 = vpack.c.b16 %v617, %v609
      %v722 = vpack.c.b16 %v618, %v610
      %v723 = vpack.c.b16 %v619, %v611
      %v724 = vpack.c.b16 %v620, %v612
      %v725 = vpack.c.b16 %v621, %v613
      %v726 = vpack.c.b16 %v622, %v614
      %v727 = vpack.c.b16 %v623, %v615
      %v728 = vpack.c.b16 %v632, %v624
      %v729 = vpack.c.b16 %v633, %v625
      %v730 = vpack.c.b16 %v634, %v626
      %v731 = vpack.c.b16 %v635, %v627
      %v732 = vpack.c.b16 %v636, %v628
      %v733 = vpack.c.b16 %v637, %v629
      %v734 = vpack.c.b16 %v638, %v630
      %v735 = vpack.c.b16 %v639, %v631
      %v736 = vpack.c.b16 %v648, %v640
      %v737 = vpack.c.b16 %v649, %v641
      %v738 = vpack.c.b16 %v650, %v642
      %v739 = vpack.c.b16 %v651, %v643
      %v740 = vpack.c.b16 %v652, %v644
      %v741 = vpack.c.b16 %v653, %v645
      %v742 = vpack.c.b16 %v654, %v646
      %v743 = vpack.c.b16 %v655, %v647
      %v744 = vpack.c.b16 %v664, %v656
      %v745 = vpack.c.b16 %v665, %v657
      %v746 = vpack.c.b16 %v666, %v658
      %v747 = vpack.c.b16 %v667, %v659
      %v748 = vpack.c.b16 %v668, %v660
      %v749 = vpack.c.b16 %v669, %v661
      %v750 = vpack.c.b16 %v670, %v662
      %v751 = vpack.c.b16 %v671, %v663
      %v752 = vpack.c.b16 %v680, %v672
      %v753 = vpack.c.b16 %v681, %v673
      %v754 = vpack.c.b16 %v682, %v674
      %v755 = vpack.c.b16 %v683, %v675
      %v756 = vpack.c.b16 %v684, %v676
      %v757 = vpack.c.b16 %v685, %v677
      %v758 = vpack.c.b16 %v686, %v678
      %v759 = vpack.c.b16 %v687, %v679
      %v760 = vpack.c.b16 %v696, %v688
      %v761 = vpack.c.b16 %v697, %v689
      %v762 = vpack.c.b16 %v698, %v690
      %v763 = vpack.c.b16 %v699, %v691
      %v764 = vpack.c.b16 %v700, %v692
      %v765 = vpack.c.b16 %v701, %v693
      %v766 = vpack.c.b16 %v702, %v694
      %v767 = vpack.c.b16 %v703, %v695
      %v960 = vunpack.c.l.b16 %v384
      %v961 = vunpack.c.l.b16 %v385
      %v962 = vunpack.c.l.b16 %v386
      %v963 = vunpack.c.l.b16 %v387
      %v964 = vunpack.c.l.b16 %v388
      %v965 = vunpack.c.l.b16 %v389
      %v966 = vunpack.c.l.b16 %v390
      %v967 = vunpack.c.l.b16 %v391
      %v968 = vunpack.c.l.b16 %v392
      %v969 = vunpack.c.l.b16 %v393
      %v970 = vunpack.c.l.b16 %v394
      %v971 = vunpack.c.l.b16 %v395
      %v972 = vunpack.c.l.b16 %v396
      %v973 = vunpack.c.l.b16 %v397
      %v974 = vunpack.c.l.b16 %v398
      %v975 = vunpack.c.l.b16 %v399
      %v976 = vunpack.c.l.b16 %v400
      %v977 = vunpack.c.l.b16 %v401
      %v978 = vunpack.c.l.b16 %v402
      %v979 = vunpack.c.l.b16 %v403
      %v980 = vunpack.c.l.b16 %v404
      %v981 = vunpack.c.l.b16 %v405
      %v982 = vunpack.c.l.b16 %v406
      %v983 = vunpack.c.l.b16 %v407
      %v984 = vunpack.c.l.b16 %v408
      %v985 = vunpack.c.l.b16 %v409
      %v986 = vunpack.c.l.b16 %v410
      %v987 = vunpack.c.l.b16 %v411
      %v988 = vunpack.c.l.b16 %v412
      %v989 = vunpack.c.l.b16 %v413
      %v990 = vunpack.c.l.b16 %v414
      %v991 = vunpack.c.l.b16 %v415
      %v992 = vunpack.c.l.b16 %v416
      %v993 = vunpack.c.l.b16 %v417
      %v994 = vunpack.c.l.b16 %v418
      %v995 = vunpack.c.l.b16 %v419
      %v996 = vunpack.c.l.b16 %v420
      %v997 = vunpack.c.l.b16 %v421
      %v998 = vunpack.c.l.b16 %v422
      %v999 = vunpack.c.l.b16 %v423
      %v1000 = vunpack.c.l.b16 %v424
      %v1001 = vunpack.c.l.b16 %v425
      %v1002 = vunpack.c.l.b16 %v426
      %v1003 = vunpack.c.l.b16 %v427
      %v1004 = vunpack.c.l.b16 %v428
      %v1005 = vunpack.c.l.b16 %v429
      %v1006 = vunpack.c.l.b16 %v430
      %v1007 = vunpack.c.l.b16 %v431
      %v1008 = vunpack.c.l.b16 %v432
      %v1009 = vunpack.c.l.b16 %v433
      %v1010 = vunpack.c.l.b16 %v434
      %v1011 = vunpack.c.l.b16 %v435
      %v1012 = vunpack.c.l.b16 %v436
      %v1013 = vunpack.c.l.b16 %v437
      %v1014 = vunpack.c.l.b16 %v438
      %v1015 = vunpack.c.l.b16 %v439
      %v1016 = vunpack.c.l.b16 %v440
      %v1017 = vunpack.c.l.b16 %v441
      %v1018 = vunpack.c.l.b16 %v442
      %v1019 = vunpack.c.l.b16 %v443
      %v1020 = vunpack.c.l.b16 %v444
      %v1021 = vunpack.c.l.b16 %v445
      %v1022 = vunpack.c.l.b16 %v446
      %v1023 = vunpack.c.l.b16 %v447
      %v1024 = vunpack.c.l.b16 %v448
      %v1025 = vunpack.c.l.b16 %v449
      %v1026 = vunpack.c.l.b16 %v450
      %v1027 = vunpack.c.l.b16 %v451
      %v1028 = vunpack.c.l.b16 %v452
      %v1029 = vunpack.c.l.b16 %v453
      %v1030 = vunpack.c.l.b16 %v454
      %v1031 = vunpack.c.l.b16 %v455
      %v1032 = vunpack.c.l.b16 %v456
      %v1033 = vunpack.c.l.b16 %v457
      %v1034 = vunpack.c.l.b16 %v458
      %v1035 = vunpack.c.l.b16 %v459
      %v1036 = vunpack.c.l.b16 %v460
      %v1037 = vunpack.c.l.b16 %v461
      %v1038 = vunpack.c.l.b16 %v462
      %v1039 = vunpack.c.l.b16 %v463
      %v1040 = vunpack.c.l.b16 %v464
      %v1041 = vunpack.c.l.b16 %v465
      %v1042 = vunpack.c.l.b16 %v466
      %v1043 = vunpack.c.l.b16 %v467
      %v1044 = vunpack.c.l.b16 %v468
      %v1045 = vunpack.c.l.b16 %v469
      %v1046 = vunpack.c.l.b16 %v470
      %v1047 = vunpack.c.l.b16 %v471
      %v1048 = vunpack.c.l.b16 %v472
      %v1049 = vunpack.c.l.b16 %v473
      %v1050 = vunpack.c.l.b16 %v474
      %v1051 = vunpack.c.l.b16 %v475
      %v1052 = vunpack.c.l.b16 %v476
      %v1053 = vunpack.c.l.b16 %v477
      %v1054 = vunpack.c.l.b16 %v478
      %v1055 = vunpack.c.l.b16 %v479
      %v1056 = vunpack.c.l.b16 %v480
      %v1057 = vunpack.c.l.b16 %v481
      %v1058 = vunpack.c.l.b16 %v482
      %v1059 = vunpack.c.l.b16 %v483
      %v1060 = vunpack.c.l.b16 %v484
      %v1061 = vunpack.c.l.b16 %v485
      %v1062 = vunpack.c.l.b16 %v486
      %v1063 = vunpack.c.l.b16 %v487
      %v1064 = vunpack.c.l.b16 %v488
      %v1065 = vunpack.c.l.b16 %v489
      %v1066 = vunpack.c.l.b16 %v490
      %v1067 = vunpack.c.l.b16 %v491
      %v1068 = vunpack.c.l.b16 %v492
      %v1069 = vunpack.c.l.b16 %v493
      %v1070 = vunpack.c.l.b16 %v494
      %v1071 = vunpack.c.l.b16 %v495
      %v1072 = vunpack.c.l.b16 %v496
      %v1073 = vunpack.c.l.b16 %v497
      %v1074 = vunpack.c.l.b16 %v498
      %v1075 = vunpack.c.l.b16 %v499
      %v1076 = vunpack.c.l.b16 %v500
      %v1077 = vunpack.c.l.b16 %v501
      %v1078 = vunpack.c.l.b16 %v502
      %v1079 = vunpack.c.l.b16 %v503
      %v1080 = vunpack.c.l.b16 %v504
      %v1081 = vunpack.c.l.b16 %v505
      %v1082 = vunpack.c.l.b16 %v506
      %v1083 = vunpack.c.l.b16 %v507
      %v1084 = vunpack.c.l.b16 %v508
      %v1085 = vunpack.c.l.b16 %v509
      %v1086 = vunpack.c.l.b16 %v510
      %v1087 = vunpack.c.l.b16 %v511
      %v1088 = vpack.c.b16 %v961, %v960
      %v1089 = vpack.c.b16 %v963, %v962
      %v1090 = vpack.c.b16 %v965, %v964
      %v1091 = vpack.c.b16 %v967, %v966
      %v1092 = vpack.c.b16 %v969, %v968
      %v1093 = vpack.c.b16 %v971, %v970
      %v1094 = vpack.c.b16 %v973, %v972
      %v1095 = vpack.c.b16 %v975, %v974
      %v1096 = vpack.c.b16 %v977, %v976
      %v1097 = vpack.c.b16 %v979, %v978
      %v1098 = vpack.c.b16 %v981, %v980
      %v1099 = vpack.c.b16 %v983, %v982
      %v1100 = vpack.c.b16 %v985, %v984
      %v1101 = vpack.c.b16 %v987, %v986
      %v1102 = vpack.c.b16 %v989, %v988
      %v1103 = vpack.c.b16 %v991, %v990
      %v1104 = vpack.c.b16 %v993, %v992
      %v1105 = vpack.c.b16 %v995, %v994
      %v1106 = vpack.c.b16 %v997, %v996
      %v1107 = vpack.c.b16 %v999, %v998
      %v1108 = vpack.c.b16 %v1001, %v1000
      %v1109 = vpack.c.b16 %v1003, %v1002
      %v1110 = vpack.c.b16 %v1005, %v1004
      %v1111 = vpack.c.b16 %v1007, %v1006
      %v1112 = vpack.c.b16 %v1009, %v1008
      %v1113 = vpack.c.b16 %v1011, %v1010
      %v1114 = vpack.c.b16 %v1013, %v1012
      %v1115 = vpack.c.b16 %v1015, %v1014
      %v1116 = vpack.c.b16 %v1017, %v1016
      %v1117 = vpack.c.b16 %v1019, %v1018
      %v1118 = vpack.c.b16 %v1021, %v1020
      %v1119 = vpack.c.b16 %v1023, %v1022
      %v1120 = vpack.c.b16 %v1025, %v1024
      %v1121 = vpack.c.b16 %v1027, %v1026
      %v1122 = vpack.c.b16 %v1029, %v1028
      %v1123 = vpack.c.b16 %v1031, %v1030
      %v1124 = vpack.c.b16 %v1033, %v1032
      %v1125 = vpack.c.b16 %v1035, %v1034
      %v1126 = vpack.c.b16 %v1037, %v1036
      %v1127 = vpack.c.b16 %v1039, %v1038
      %v1128 = vpack.c.b16 %v1041, %v1040
      %v1129 = vpack.c.b16 %v1043, %v1042
      %v1130 = vpack.c.b16 %v1045, %v1044
      %v1131 = vpack.c.b16 %v1047, %v1046
      %v1132 = vpack.c.b16 %v1049, %v1048
      %v1133 = vpack.c.b16 %v1051, %v1050
      %v1134 = vpack.c.b16 %v1053, %v1052
      %v1135 = vpack.c.b16 %v1055, %v1054
      %v1136 = vpack.c.b16 %v1057, %v1056
      %v1137 = vpack.c.b16 %v1059, %v1058
      %v1138 = vpack.c.b16 %v1061, %v1060
      %v1139 = vpack.c.b16 %v1063, %v1062
      %v1140 = vpack.c.b16 %v1065, %v1064
      %v1141 = vpack.c.b16 %v1067, %v1066
      %v1142 = vpack.c.b16 %v1069, %v1068
      %v1143 = vpack.c.b16 %v1071, %v1070
      %v1144 = vpack.c.b16 %v1073, %v1072
      %v1145 = vpack.c.b16 %v1075, %v1074
      %v1146 = vpack.c.b16 %v1077, %v1076
      %v1147 = vpack.c.b16 %v1079, %v1078
      %v1148 = vpack.c.b16 %v1081, %v1080
      %v1149 = vpack.c.b16 %v1083, %v1082
      %v1150 = vpack.c.b16 %v1085, %v1084
      %v1151 = vpack.c.b16 %v1087, %v1086
      %1216 = vmatprep.subr.bf16.mxu0 0
      %1217 = vmatpush1.bf16.msra.mxu0 %v1095
      %1218 = vmatprep.subr.bf16.mxu0 0
      %1219 = vmatpush1.bf16.msra.mxu0 %v1094
      %1220 = vmatprep.subr.bf16.mxu0 0
      %1221 = vmatpush1.bf16.msra.mxu0 %v1093
      %1222 = vmatprep.subr.bf16.mxu0 0
      %1223 = vmatpush1.bf16.msra.mxu0 %v1092
      %1224 = vmatprep.subr.bf16.mxu0 0
      %1225 = vmatpush1.bf16.msra.mxu0 %v1091
      %1226 = vmatprep.subr.bf16.mxu0 0
      %1227 = vmatpush1.bf16.msra.mxu0 %v1090
      %1228 = vmatprep.subr.bf16.mxu0 0
      %1229 = vmatpush1.bf16.msra.mxu0 %v1089
      %1230 = vmatprep.subr.bf16.mxu0 0
      %1231 = vmatpush1.bf16.msra.mxu0 %v1088
      %1232 = vmatprep.subr.bf16.mxu0 0
      %1233 = vmatpush2.bf16.msra.mxu0 %v1103
      %1234 = vmatprep.subr.bf16.mxu0 0
      %1235 = vmatpush2.bf16.msra.mxu0 %v1102
      %1236 = vmatprep.subr.bf16.mxu0 0
      %1237 = vmatpush2.bf16.msra.mxu0 %v1101
      %1238 = vmatprep.subr.bf16.mxu0 0
      %1239 = vmatpush2.bf16.msra.mxu0 %v1100
      %1240 = vmatprep.subr.bf16.mxu0 0
      %1241 = vmatpush2.bf16.msra.mxu0 %v1099
      %1242 = vmatprep.subr.bf16.mxu0 0
      %1243 = vmatpush2.bf16.msra.mxu0 %v1098
      %1244 = vmatprep.subr.bf16.mxu0 0
      %1245 = vmatpush2.bf16.msra.mxu0 %v1097
      %1246 = vmatprep.subr.bf16.mxu0 0
      %1247 = vmatpush2.bf16.msra.mxu0 %v1096
      %1248 = vmatprep.mubr.bf16.mxu0 %v705
      %1249 = vmatmul.mubr.bf16.gmra.mxu0 %v704
      %v1250 = vpop.f32.mrf.mxu0
      %v1251 = vadd.f32 0.0, %v1250
      %v1252 = vpop.f32.mrf.mxu0
      %v1253 = vpop.f32.mrf.mxu0
      %v1254 = vadd.f32 0.0, %v1253
      %v1255 = vpop.f32.mrf.mxu0
      %1256 = vmatprep.mubr.bf16.mxu0 %v713
      %1257 = vmatmul.mubr.bf16.gmra.mxu0 %v712
      %v1258 = vpop.f32.mrf.mxu0
      %v1259 = vadd.f32 0.0, %v1258
      %v1260 = vpop.f32.mrf.mxu0
      %v1261 = vpop.f32.mrf.mxu0
      %v1262 = vadd.f32 0.0, %v1261
      %v1263 = vpop.f32.mrf.mxu0
      %1264 = vmatprep.mubr.bf16.mxu0 %v721
      %1265 = vmatmul.mubr.bf16.gmra.mxu0 %v720
      %v1266 = vpop.f32.mrf.mxu0
      %v1267 = vadd.f32 0.0, %v1266
      %v1268 = vpop.f32.mrf.mxu0
      %v1269 = vpop.f32.mrf.mxu0
      %v1270 = vadd.f32 0.0, %v1269
      %v1271 = vpop.f32.mrf.mxu0
      %1272 = vmatprep.mubr.bf16.mxu0 %v729
      %1273 = vmatmul.mubr.bf16.gmra.mxu0 %v728
      %v1274 = vpop.f32.mrf.mxu0
      %v1275 = vadd.f32 0.0, %v1274
      %v1276 = vpop.f32.mrf.mxu0
      %v1277 = vpop.f32.mrf.mxu0
      %v1278 = vadd.f32 0.0, %v1277
      %v1279 = vpop.f32.mrf.mxu0
      %1280 = vmatprep.mubr.bf16.mxu0 %v737
      %1281 = vmatmul.mubr.bf16.gmra.mxu0 %v736
      %v1282 = vpop.f32.mrf.mxu0
      %v1283 = vadd.f32 0.0, %v1282
      %v1284 = vpop.f32.mrf.mxu0
      %v1285 = vpop.f32.mrf.mxu0
      %v1286 = vadd.f32 0.0, %v1285
      %v1287 = vpop.f32.mrf.mxu0
      %1288 = vmatprep.mubr.bf16.mxu0 %v745
      %1289 = vmatmul.mubr.bf16.gmra.mxu0 %v744
      %v1290 = vpop.f32.mrf.mxu0
      %v1291 = vadd.f32 0.0, %v1290
      %v1292 = vpop.f32.mrf.mxu0
      %v1293 = vpop.f32.mrf.mxu0
      %v1294 = vadd.f32 0.0, %v1293
      %v1295 = vpop.f32.mrf.mxu0
      %1296 = vmatprep.mubr.bf16.mxu0 %v753
      %1297 = vmatmul.mubr.bf16.gmra.mxu0 %v752
      %v1298 = vpop.f32.mrf.mxu0
      %v1299 = vadd.f32 0.0, %v1298
      %v1300 = vpop.f32.mrf.mxu0
      %v1301 = vpop.f32.mrf.mxu0
      %v1302 = vadd.f32 0.0, %v1301
      %v1303 = vpop.f32.mrf.mxu0
      %1304 = vmatprep.mubr.bf16.mxu0 %v761
      %1305 = vmatmul.mubr.bf16.gmra.mxu0 %v760
      %v1306 = vpop.f32.mrf.mxu0
      %v1307 = vadd.f32 0.0, %v1306
      %v1308 = vpop.f32.mrf.mxu0
      %v1309 = vpop.f32.mrf.mxu0
      %v1310 = vadd.f32 0.0, %v1309
      %v1311 = vpop.f32.mrf.mxu0
      %1312 = vdwg.mxu0
      %1313 = vmatprep.subr.bf16.mxu0 0
      %1314 = vmatpush1.bf16.msra.mxu0 %v1111
      %1315 = vmatprep.subr.bf16.mxu0 0
      %1316 = vmatpush1.bf16.msra.mxu0 %v1110
      %1317 = vmatprep.subr.bf16.mxu0 0
      %1318 = vmatpush1.bf16.msra.mxu0 %v1109
      %1319 = vmatprep.subr.bf16.mxu0 0
      %1320 = vmatpush1.bf16.msra.mxu0 %v1108
      %1321 = vmatprep.subr.bf16.mxu0 0
      %1322 = vmatpush1.bf16.msra.mxu0 %v1107
      %1323 = vmatprep.subr.bf16.mxu0 0
      %1324 = vmatpush1.bf16.msra.mxu0 %v1106
      %1325 = vmatprep.subr.bf16.mxu0 0
      %1326 = vmatpush1.bf16.msra.mxu0 %v1105
      %1327 = vmatprep.subr.bf16.mxu0 0
      %1328 = vmatpush1.bf16.msra.mxu0 %v1104
      %1329 = vmatprep.subr.bf16.mxu0 0
      %1330 = vmatpush2.bf16.msra.mxu0 %v1119
      %1331 = vmatprep.subr.bf16.mxu0 0
      %1332 = vmatpush2.bf16.msra.mxu0 %v1118
      %1333 = vmatprep.subr.bf16.mxu0 0
      %1334 = vmatpush2.bf16.msra.mxu0 %v1117
      %1335 = vmatprep.subr.bf16.mxu0 0
      %1336 = vmatpush2.bf16.msra.mxu0 %v1116
      %1337 = vmatprep.subr.bf16.mxu0 0
      %1338 = vmatpush2.bf16.msra.mxu0 %v1115
      %1339 = vmatprep.subr.bf16.mxu0 0
      %1340 = vmatpush2.bf16.msra.mxu0 %v1114
      %1341 = vmatprep.subr.bf16.mxu0 0
      %1342 = vmatpush2.bf16.msra.mxu0 %v1113
      %1343 = vmatprep.subr.bf16.mxu0 0
      %1344 = vmatpush2.bf16.msra.mxu0 %v1112
      %1345 = vmatprep.mubr.bf16.mxu0 %v707
      %1346 = vmatmul.mubr.bf16.gmra.mxu0 %v706
      %v1347 = vpop.f32.mrf.mxu0
      %v1348 = vadd.f32 %v1251, %v1347
      %v1349 = vpop.f32.mrf.mxu0
      %v1350 = vpop.f32.mrf.mxu0
      %v1351 = vadd.f32 %v1254, %v1350
      %v1352 = vpop.f32.mrf.mxu0
      %1353 = vmatprep.mubr.bf16.mxu0 %v715
      %1354 = vmatmul.mubr.bf16.gmra.mxu0 %v714
      %v1355 = vpop.f32.mrf.mxu0
      %v1356 = vadd.f32 %v1259, %v1355
      %v1357 = vpop.f32.mrf.mxu0
      %v1358 = vpop.f32.mrf.mxu0
      %v1359 = vadd.f32 %v1262, %v1358
      %v1360 = vpop.f32.mrf.mxu0
      %1361 = vmatprep.mubr.bf16.mxu0 %v723
      %1362 = vmatmul.mubr.bf16.gmra.mxu0 %v722
      %v1363 = vpop.f32.mrf.mxu0
      %v1364 = vadd.f32 %v1267, %v1363
      %v1365 = vpop.f32.mrf.mxu0
      %v1366 = vpop.f32.mrf.mxu0
      %v1367 = vadd.f32 %v1270, %v1366
      %v1368 = vpop.f32.mrf.mxu0
      %1369 = vmatprep.mubr.bf16.mxu0 %v731
      %1370 = vmatmul.mubr.bf16.gmra.mxu0 %v730
      %v1371 = vpop.f32.mrf.mxu0
      %v1372 = vadd.f32 %v1275, %v1371
      %v1373 = vpop.f32.mrf.mxu0
      %v1374 = vpop.f32.mrf.mxu0
      %v1375 = vadd.f32 %v1278, %v1374
      %v1376 = vpop.f32.mrf.mxu0
      %1377 = vmatprep.mubr.bf16.mxu0 %v739
      %1378 = vmatmul.mubr.bf16.gmra.mxu0 %v738
      %v1379 = vpop.f32.mrf.mxu0
      %v1380 = vadd.f32 %v1283, %v1379
      %v1381 = vpop.f32.mrf.mxu0
      %v1382 = vpop.f32.mrf.mxu0
      %v1383 = vadd.f32 %v1286, %v1382
      %v1384 = vpop.f32.mrf.mxu0
      %1385 = vmatprep.mubr.bf16.mxu0 %v747
      %1386 = vmatmul.mubr.bf16.gmra.mxu0 %v746
      %v1387 = vpop.f32.mrf.mxu0
      %v1388 = vadd.f32 %v1291, %v1387
      %v1389 = vpop.f32.mrf.mxu0
      %v1390 = vpop.f32.mrf.mxu0
      %v1391 = vadd.f32 %v1294, %v1390
      %v1392 = vpop.f32.mrf.mxu0
      %1393 = vmatprep.mubr.bf16.mxu0 %v755
      %1394 = vmatmul.mubr.bf16.gmra.mxu0 %v754
      %v1395 = vpop.f32.mrf.mxu0
      %v1396 = vadd.f32 %v1299, %v1395
      %v1397 = vpop.f32.mrf.mxu0
      %v1398 = vpop.f32.mrf.mxu0
      %v1399 = vadd.f32 %v1302, %v1398
      %v1400 = vpop.f32.mrf.mxu0
      %1401 = vmatprep.mubr.bf16.mxu0 %v763
      %1402 = vmatmul.mubr.bf16.gmra.mxu0 %v762
      %v1403 = vpop.f32.mrf.mxu0
      %v1404 = vadd.f32 %v1307, %v1403
      %v1405 = vpop.f32.mrf.mxu0
      %v1406 = vpop.f32.mrf.mxu0
      %v1407 = vadd.f32 %v1310, %v1406
      %v1408 = vpop.f32.mrf.mxu0
      %1409 = vdwg.mxu0
      %1410 = vmatprep.subr.bf16.mxu0 0
      %1411 = vmatpush1.bf16.msra.mxu0 %v1127
      %1412 = vmatprep.subr.bf16.mxu0 0
      %1413 = vmatpush1.bf16.msra.mxu0 %v1126
      %1414 = vmatprep.subr.bf16.mxu0 0
      %1415 = vmatpush1.bf16.msra.mxu0 %v1125
      %1416 = vmatprep.subr.bf16.mxu0 0
      %1417 = vmatpush1.bf16.msra.mxu0 %v1124
      %1418 = vmatprep.subr.bf16.mxu0 0
      %1419 = vmatpush1.bf16.msra.mxu0 %v1123
      %1420 = vmatprep.subr.bf16.mxu0 0
      %1421 = vmatpush1.bf16.msra.mxu0 %v1122
      %1422 = vmatprep.subr.bf16.mxu0 0
      %1423 = vmatpush1.bf16.msra.mxu0 %v1121
      %1424 = vmatprep.subr.bf16.mxu0 0
      %1425 = vmatpush1.bf16.msra.mxu0 %v1120
      %1426 = vmatprep.subr.bf16.mxu0 0
      %1427 = vmatpush2.bf16.msra.mxu0 %v1135
      %1428 = vmatprep.subr.bf16.mxu0 0
      %1429 = vmatpush2.bf16.msra.mxu0 %v1134
      %1430 = vmatprep.subr.bf16.mxu0 0
      %1431 = vmatpush2.bf16.msra.mxu0 %v1133
      %1432 = vmatprep.subr.bf16.mxu0 0
      %1433 = vmatpush2.bf16.msra.mxu0 %v1132
      %1434 = vmatprep.subr.bf16.mxu0 0
      %1435 = vmatpush2.bf16.msra.mxu0 %v1131
      %1436 = vmatprep.subr.bf16.mxu0 0
      %1437 = vmatpush2.bf16.msra.mxu0 %v1130
      %1438 = vmatprep.subr.bf16.mxu0 0
      %1439 = vmatpush2.bf16.msra.mxu0 %v1129
      %1440 = vmatprep.subr.bf16.mxu0 0
      %1441 = vmatpush2.bf16.msra.mxu0 %v1128
      %1442 = vmatprep.mubr.bf16.mxu0 %v709
      %1443 = vmatmul.mubr.bf16.gmra.mxu0 %v708
      %v1444 = vpop.f32.mrf.mxu0
      %v1445 = vadd.f32 %v1348, %v1444
      %v1446 = vpop.f32.mrf.mxu0
      %v1447 = vpop.f32.mrf.mxu0
      %v1448 = vadd.f32 %v1351, %v1447
      %v1449 = vpop.f32.mrf.mxu0
      %1450 = vmatprep.mubr.bf16.mxu0 %v717
      %1451 = vmatmul.mubr.bf16.gmra.mxu0 %v716
      %v1452 = vpop.f32.mrf.mxu0
      %v1453 = vadd.f32 %v1356, %v1452
      %v1454 = vpop.f32.mrf.mxu0
      %v1455 = vpop.f32.mrf.mxu0
      %v1456 = vadd.f32 %v1359, %v1455
      %v1457 = vpop.f32.mrf.mxu0
      %1458 = vmatprep.mubr.bf16.mxu0 %v725
      %1459 = vmatmul.mubr.bf16.gmra.mxu0 %v724
      %v1460 = vpop.f32.mrf.mxu0
      %v1461 = vadd.f32 %v1364, %v1460
      %v1462 = vpop.f32.mrf.mxu0
      %v1463 = vpop.f32.mrf.mxu0
      %v1464 = vadd.f32 %v1367, %v1463
      %v1465 = vpop.f32.mrf.mxu0
      %1466 = vmatprep.mubr.bf16.mxu0 %v733
      %1467 = vmatmul.mubr.bf16.gmra.mxu0 %v732
      %v1468 = vpop.f32.mrf.mxu0
      %v1469 = vadd.f32 %v1372, %v1468
      %v1470 = vpop.f32.mrf.mxu0
      %v1471 = vpop.f32.mrf.mxu0
      %v1472 = vadd.f32 %v1375, %v1471
      %v1473 = vpop.f32.mrf.mxu0
      %1474 = vmatprep.mubr.bf16.mxu0 %v741
      %1475 = vmatmul.mubr.bf16.gmra.mxu0 %v740
      %v1476 = vpop.f32.mrf.mxu0
      %v1477 = vadd.f32 %v1380, %v1476
      %v1478 = vpop.f32.mrf.mxu0
      %v1479 = vpop.f32.mrf.mxu0
      %v1480 = vadd.f32 %v1383, %v1479
      %v1481 = vpop.f32.mrf.mxu0
      %1482 = vmatprep.mubr.bf16.mxu0 %v749
      %1483 = vmatmul.mubr.bf16.gmra.mxu0 %v748
      %v1484 = vpop.f32.mrf.mxu0
      %v1485 = vadd.f32 %v1388, %v1484
      %v1486 = vpop.f32.mrf.mxu0
      %v1487 = vpop.f32.mrf.mxu0
      %v1488 = vadd.f32 %v1391, %v1487
      %v1489 = vpop.f32.mrf.mxu0
      %1490 = vmatprep.mubr.bf16.mxu0 %v757
      %1491 = vmatmul.mubr.bf16.gmra.mxu0 %v756
      %v1492 = vpop.f32.mrf.mxu0
      %v1493 = vadd.f32 %v1396, %v1492
      %v1494 = vpop.f32.mrf.mxu0
      %v1495 = vpop.f32.mrf.mxu0
      %v1496 = vadd.f32 %v1399, %v1495
      %v1497 = vpop.f32.mrf.mxu0
      %1498 = vmatprep.mubr.bf16.mxu0 %v765
      %1499 = vmatmul.mubr.bf16.gmra.mxu0 %v764
      %v1500 = vpop.f32.mrf.mxu0
      %v1501 = vadd.f32 %v1404, %v1500
      %v1502 = vpop.f32.mrf.mxu0
      %v1503 = vpop.f32.mrf.mxu0
      %v1504 = vadd.f32 %v1407, %v1503
      %v1505 = vpop.f32.mrf.mxu0
      %1506 = vdwg.mxu0
      %1507 = vmatprep.subr.bf16.mxu0 0
      %1508 = vmatpush1.bf16.msra.mxu0 %v1143
      %1509 = vmatprep.subr.bf16.mxu0 0
      %1510 = vmatpush1.bf16.msra.mxu0 %v1142
      %1511 = vmatprep.subr.bf16.mxu0 0
      %1512 = vmatpush1.bf16.msra.mxu0 %v1141
      %1513 = vmatprep.subr.bf16.mxu0 0
      %1514 = vmatpush1.bf16.msra.mxu0 %v1140
      %1515 = vmatprep.subr.bf16.mxu0 0
      %1516 = vmatpush1.bf16.msra.mxu0 %v1139
      %1517 = vmatprep.subr.bf16.mxu0 0
      %1518 = vmatpush1.bf16.msra.mxu0 %v1138
      %1519 = vmatprep.subr.bf16.mxu0 0
      %1520 = vmatpush1.bf16.msra.mxu0 %v1137
      %1521 = vmatprep.subr.bf16.mxu0 0
      %1522 = vmatpush1.bf16.msra.mxu0 %v1136
      %1523 = vmatprep.subr.bf16.mxu0 0
      %1524 = vmatpush2.bf16.msra.mxu0 %v1151
      %1525 = vmatprep.subr.bf16.mxu0 0
      %1526 = vmatpush2.bf16.msra.mxu0 %v1150
      %1527 = vmatprep.subr.bf16.mxu0 0
      %1528 = vmatpush2.bf16.msra.mxu0 %v1149
      %1529 = vmatprep.subr.bf16.mxu0 0
      %1530 = vmatpush2.bf16.msra.mxu0 %v1148
      %1531 = vmatprep.subr.bf16.mxu0 0
      %1532 = vmatpush2.bf16.msra.mxu0 %v1147
      %1533 = vmatprep.subr.bf16.mxu0 0
      %1534 = vmatpush2.bf16.msra.mxu0 %v1146
      %1535 = vmatprep.subr.bf16.mxu0 0
      %1536 = vmatpush2.bf16.msra.mxu0 %v1145
      %1537 = vmatprep.subr.bf16.mxu0 0
      %1538 = vmatpush2.bf16.msra.mxu0 %v1144
      %1539 = vmatprep.mubr.bf16.mxu0 %v711
      %1540 = vmatmul.mubr.bf16.gmra.mxu0 %v710
      %v1541 = vpop.f32.mrf.mxu0
      %v1542 = vadd.f32 %v1445, %v1541
      %v1543 = vpop.f32.mrf.mxu0
      %v1544 = vpop.f32.mrf.mxu0
      %v1545 = vadd.f32 %v1448, %v1544
      %v1546 = vpop.f32.mrf.mxu0
      %1547 = vmatprep.mubr.bf16.mxu0 %v719
      %1548 = vmatmul.mubr.bf16.gmra.mxu0 %v718
      %v1549 = vpop.f32.mrf.mxu0
      %v1550 = vadd.f32 %v1453, %v1549
      %v1551 = vpop.f32.mrf.mxu0
      %v1552 = vpop.f32.mrf.mxu0
      %v1553 = vadd.f32 %v1456, %v1552
      %v1554 = vpop.f32.mrf.mxu0
      %1555 = vmatprep.mubr.bf16.mxu0 %v727
      %1556 = vmatmul.mubr.bf16.gmra.mxu0 %v726
      %v1557 = vpop.f32.mrf.mxu0
      %v1558 = vadd.f32 %v1461, %v1557
      %v1559 = vpop.f32.mrf.mxu0
      %v1560 = vpop.f32.mrf.mxu0
      %v1561 = vadd.f32 %v1464, %v1560
      %v1562 = vpop.f32.mrf.mxu0
      %1563 = vmatprep.mubr.bf16.mxu0 %v735
      %1564 = vmatmul.mubr.bf16.gmra.mxu0 %v734
      %v1565 = vpop.f32.mrf.mxu0
      %v1566 = vadd.f32 %v1469, %v1565
      %v1567 = vpop.f32.mrf.mxu0
      %v1568 = vpop.f32.mrf.mxu0
      %v1569 = vadd.f32 %v1472, %v1568
      %v1570 = vpop.f32.mrf.mxu0
      %1571 = vmatprep.mubr.bf16.mxu0 %v743
      %1572 = vmatmul.mubr.bf16.gmra.mxu0 %v742
      %v1573 = vpop.f32.mrf.mxu0
      %v1574 = vadd.f32 %v1477, %v1573
      %v1575 = vpop.f32.mrf.mxu0
      %v1576 = vpop.f32.mrf.mxu0
      %v1577 = vadd.f32 %v1480, %v1576
      %v1578 = vpop.f32.mrf.mxu0
      %1579 = vmatprep.mubr.bf16.mxu0 %v751
      %1580 = vmatmul.mubr.bf16.gmra.mxu0 %v750
      %v1581 = vpop.f32.mrf.mxu0
      %v1582 = vadd.f32 %v1485, %v1581
      %v1583 = vpop.f32.mrf.mxu0
      %v1584 = vpop.f32.mrf.mxu0
      %v1585 = vadd.f32 %v1488, %v1584
      %v1586 = vpop.f32.mrf.mxu0
      %1587 = vmatprep.mubr.bf16.mxu0 %v759
      %1588 = vmatmul.mubr.bf16.gmra.mxu0 %v758
      %v1589 = vpop.f32.mrf.mxu0
      %v1590 = vadd.f32 %v1493, %v1589
      %v1591 = vpop.f32.mrf.mxu0
      %v1592 = vpop.f32.mrf.mxu0
      %v1593 = vadd.f32 %v1496, %v1592
      %v1594 = vpop.f32.mrf.mxu0
      %1595 = vmatprep.mubr.bf16.mxu0 %v767
      %1596 = vmatmul.mubr.bf16.gmra.mxu0 %v766
      %v1597 = vpop.f32.mrf.mxu0
      %v1598 = vadd.f32 %v1501, %v1597
      %v1599 = vpop.f32.mrf.mxu0
      %v1600 = vpop.f32.mrf.mxu0
      %v1601 = vadd.f32 %v1504, %v1600
      %v1602 = vpop.f32.mrf.mxu0
      %1603 = vdwg.mxu0
      %v1604 = vld [vmem:[%s5] sm:$0xf]
      %v1605 = vld [vmem:[%s5 + $0x4] sm:$0xf]
      %v1606 = vld [vmem:[%s5 + $0x8] sm:$0xf]
      %v1607 = vld [vmem:[%s5 + $0xc] sm:$0xf]
      %v1608 = vld [vmem:[%s5 + $0x10] sm:$0xf]
      %v1609 = vld [vmem:[%s5 + $0x14] sm:$0xf]
      %v1610 = vld [vmem:[%s5 + $0x18] sm:$0xf]
      %v1611 = vld [vmem:[%s5 + $0x1c] sm:$0xf]
      %v1612 = vld [vmem:[%s5 + $0x20] sm:$0xf]
      %v1613 = vld [vmem:[%s5 + $0x24] sm:$0xf]
      %v1614 = vld [vmem:[%s5 + $0x28] sm:$0xf]
      %v1615 = vld [vmem:[%s5 + $0x2c] sm:$0xf]
      %v1616 = vld [vmem:[%s5 + $0x30] sm:$0xf]
      %v1617 = vld [vmem:[%s5 + $0x34] sm:$0xf]
      %v1618 = vld [vmem:[%s5 + $0x38] sm:$0xf]
      %v1619 = vld [vmem:[%s5 + $0x3c] sm:$0xf]
      %v1620 = vld [vmem:[%s4] sm:$0x1]
      %v1621 = vld [vmem:[%s6] sm:$0x1]
      %v1622 = vlaneseq
      %v1623 = vshrl.u32 %v1622, 7
      %v1624 = vadd.s32 %v1623, 8
      %v1625 = vadd.s32 %v1623, 16
      %v1626 = vadd.s32 %v1623, 24
      %v1627 = vadd.s32 %v1623, 32
      %v1628 = vadd.s32 %v1623, 40
      %v1629 = vadd.s32 %v1623, 48
      %v1630 = vadd.s32 %v1623, 56
      %v1631 = vadd.s32 %v1623, 64
      %v1632 = vadd.s32 %v1623, 72
      %v1633 = vadd.s32 %v1623, 80
      %v1634 = vadd.s32 %v1623, 88
      %v1635 = vadd.s32 %v1623, 96
      %v1636 = vadd.s32 %v1623, 104
      %v1637 = vadd.s32 %v1623, 112
      %v1638 = vadd.s32 %v1623, 120
      %v1639 = vlaneseq
      %v1640 = vand.u32 %v1639, 127
      %vm1641 = vcmp.eq.s32.totalorder %v1623, %v1640
      %vm1642 = vcmp.eq.s32.totalorder %v1624, %v1640
      %vm1643 = vcmp.eq.s32.totalorder %v1625, %v1640
      %vm1644 = vcmp.eq.s32.totalorder %v1626, %v1640
      %vm1645 = vcmp.eq.s32.totalorder %v1627, %v1640
      %vm1646 = vcmp.eq.s32.totalorder %v1628, %v1640
      %vm1647 = vcmp.eq.s32.totalorder %v1629, %v1640
      %vm1648 = vcmp.eq.s32.totalorder %v1630, %v1640
      %vm1649 = vcmp.eq.s32.totalorder %v1631, %v1640
      %vm1650 = vcmp.eq.s32.totalorder %v1632, %v1640
      %vm1651 = vcmp.eq.s32.totalorder %v1633, %v1640
      %vm1652 = vcmp.eq.s32.totalorder %v1634, %v1640
      %vm1653 = vcmp.eq.s32.totalorder %v1635, %v1640
      %vm1654 = vcmp.eq.s32.totalorder %v1636, %v1640
      %vm1655 = vcmp.eq.s32.totalorder %v1637, %v1640
      %vm1656 = vcmp.eq.s32.totalorder %v1638, %v1640
      %v1657 = vsel %vm1641, 1, 0
      %v1658 = vsel %vm1642, 1, 0
      %v1659 = vsel %vm1643, 1, 0
      %v1660 = vsel %vm1644, 1, 0
      %v1661 = vsel %vm1645, 1, 0
      %v1662 = vsel %vm1646, 1, 0
      %v1663 = vsel %vm1647, 1, 0
      %v1664 = vsel %vm1648, 1, 0
      %v1665 = vsel %vm1649, 1, 0
      %v1666 = vsel %vm1650, 1, 0
      %v1667 = vsel %vm1651, 1, 0
      %v1668 = vsel %vm1652, 1, 0
      %v1669 = vsel %vm1653, 1, 0
      %v1670 = vsel %vm1654, 1, 0
      %v1671 = vsel %vm1655, 1, 0
      %v1672 = vsel %vm1656, 1, 0
      %v1673 = vcvt.s32.f32 %v1657
      %v1674 = vcvt.s32.f32 %v1658
      %v1675 = vcvt.s32.f32 %v1659
      %v1676 = vcvt.s32.f32 %v1660
      %v1677 = vcvt.s32.f32 %v1661
      %v1678 = vcvt.s32.f32 %v1662
      %v1679 = vcvt.s32.f32 %v1663
      %v1680 = vcvt.s32.f32 %v1664
      %v1681 = vcvt.s32.f32 %v1665
      %v1682 = vcvt.s32.f32 %v1666
      %v1683 = vcvt.s32.f32 %v1667
      %v1684 = vcvt.s32.f32 %v1668
      %v1685 = vcvt.s32.f32 %v1669
      %v1686 = vcvt.s32.f32 %v1670
      %v1687 = vcvt.s32.f32 %v1671
      %v1688 = vcvt.s32.f32 %v1672
      %v1689 = vld [vmem:[%s303] sm:$0xf]
      %v1690 = vld [vmem:[%s303 + $0x4] sm:$0xf]
      %v1691 = vld [vmem:[%s303 + $0x8] sm:$0xf]
      %v1692 = vld [vmem:[%s303 + $0xc] sm:$0xf]
      %v1693 = vld [vmem:[%s303 + $0x10] sm:$0xf]
      %v1694 = vld [vmem:[%s303 + $0x14] sm:$0xf]
      %v1695 = vld [vmem:[%s303 + $0x18] sm:$0xf]
      %v1696 = vld [vmem:[%s303 + $0x1c] sm:$0xf]
      %v1697 = vld [vmem:[%s303 + $0x20] sm:$0xf]
      %v1698 = vld [vmem:[%s303 + $0x24] sm:$0xf]
      %v1699 = vld [vmem:[%s303 + $0x28] sm:$0xf]
      %v1700 = vld [vmem:[%s303 + $0x2c] sm:$0xf]
      %v1701 = vld [vmem:[%s303 + $0x30] sm:$0xf]
      %v1702 = vld [vmem:[%s303 + $0x34] sm:$0xf]
      %v1703 = vld [vmem:[%s303 + $0x38] sm:$0xf]
      %v1704 = vld [vmem:[%s303 + $0x3c] sm:$0xf]
      %v1705 = vunpack.c.l.bf16 %v1689
      %v1706 = vunpack.c.l.bf16 %v1690
      %v1707 = vunpack.c.l.bf16 %v1691
      %v1708 = vunpack.c.l.bf16 %v1692
      %v1709 = vunpack.c.l.bf16 %v1693
      %v1710 = vunpack.c.l.bf16 %v1694
      %v1711 = vunpack.c.l.bf16 %v1695
      %v1712 = vunpack.c.l.bf16 %v1696
      %v1713 = vunpack.c.l.bf16 %v1697
      %v1714 = vunpack.c.l.bf16 %v1698
      %v1715 = vunpack.c.l.bf16 %v1699
      %v1716 = vunpack.c.l.bf16 %v1700
      %v1717 = vunpack.c.l.bf16 %v1701
      %v1718 = vunpack.c.l.bf16 %v1702
      %v1719 = vunpack.c.l.bf16 %v1703
      %v1720 = vunpack.c.l.bf16 %v1704
      %v1721 = vld [vmem:[%s308] sm:$0xf]
      %v1722 = vld [vmem:[%s308 + $0x4] sm:$0xf]
      %v1723 = vld [vmem:[%s308 + $0x8] sm:$0xf]
      %v1724 = vld [vmem:[%s308 + $0xc] sm:$0xf]
      %v1725 = vld [vmem:[%s308 + $0x10] sm:$0xf]
      %v1726 = vld [vmem:[%s308 + $0x14] sm:$0xf]
      %v1727 = vld [vmem:[%s308 + $0x18] sm:$0xf]
      %v1728 = vld [vmem:[%s308 + $0x1c] sm:$0xf]
      %v1729 = vld [vmem:[%s308 + $0x20] sm:$0xf]
      %v1730 = vld [vmem:[%s308 + $0x24] sm:$0xf]
      %v1731 = vld [vmem:[%s308 + $0x28] sm:$0xf]
      %v1732 = vld [vmem:[%s308 + $0x2c] sm:$0xf]
      %v1733 = vld [vmem:[%s308 + $0x30] sm:$0xf]
      %v1734 = vld [vmem:[%s308 + $0x34] sm:$0xf]
      %v1735 = vld [vmem:[%s308 + $0x38] sm:$0xf]
      %v1736 = vld [vmem:[%s308 + $0x3c] sm:$0xf]
      %v1737 = vunpack.c.l.bf16 %v1721
      %v1738 = vunpack.c.l.bf16 %v1722
      %v1739 = vunpack.c.l.bf16 %v1723
      %v1740 = vunpack.c.l.bf16 %v1724
      %v1741 = vunpack.c.l.bf16 %v1725
      %v1742 = vunpack.c.l.bf16 %v1726
      %v1743 = vunpack.c.l.bf16 %v1727
      %v1744 = vunpack.c.l.bf16 %v1728
      %v1745 = vunpack.c.l.bf16 %v1729
      %v1746 = vunpack.c.l.bf16 %v1730
      %v1747 = vunpack.c.l.bf16 %v1731
      %v1748 = vunpack.c.l.bf16 %v1732
      %v1749 = vunpack.c.l.bf16 %v1733
      %v1750 = vunpack.c.l.bf16 %v1734
      %v1751 = vunpack.c.l.bf16 %v1735
      %v1752 = vunpack.c.l.bf16 %v1736
      %v1769 = vunpack.c.l.b16 %v1689
      %v1770 = vunpack.c.l.b16 %v1690
      %v1771 = vunpack.c.l.b16 %v1691
      %v1772 = vunpack.c.l.b16 %v1692
      %v1773 = vunpack.c.l.b16 %v1693
      %v1774 = vunpack.c.l.b16 %v1694
      %v1775 = vunpack.c.l.b16 %v1695
      %v1776 = vunpack.c.l.b16 %v1696
      %v1777 = vunpack.c.l.b16 %v1697
      %v1778 = vunpack.c.l.b16 %v1698
      %v1779 = vunpack.c.l.b16 %v1699
      %v1780 = vunpack.c.l.b16 %v1700
      %v1781 = vunpack.c.l.b16 %v1701
      %v1782 = vunpack.c.l.b16 %v1702
      %v1783 = vunpack.c.l.b16 %v1703
      %v1784 = vunpack.c.l.b16 %v1704
      %v1785 = vpack.c.b16 %v1770, %v1769
      %v1786 = vpack.c.b16 %v1772, %v1771
      %v1787 = vpack.c.b16 %v1774, %v1773
      %v1788 = vpack.c.b16 %v1776, %v1775
      %v1789 = vpack.c.b16 %v1778, %v1777
      %v1790 = vpack.c.b16 %v1780, %v1779
      %v1791 = vpack.c.b16 %v1782, %v1781
      %v1792 = vpack.c.b16 %v1784, %v1783
      %1801 = vmatprep.subr.bf16.mxu0 0
      %1802 = vmatpush1.bf16.xpose.msra.mxu0 %v1792
      %1803 = vmatprep.subr.bf16.mxu0 0
      %1804 = vmatpush1.bf16.xpose.msra.mxu0 %v1791
      %1805 = vmatprep.subr.bf16.mxu0 0
      %1806 = vmatpush1.bf16.xpose.msra.mxu0 %v1790
      %1807 = vmatprep.subr.bf16.mxu0 0
      %1808 = vmatpush1.bf16.xpose.msra.mxu0 %v1789
      %1809 = vmatprep.subr.bf16.mxu0 0
      %1810 = vmatpush1.bf16.xpose.msra.mxu0 %v1788
      %1811 = vmatprep.subr.bf16.mxu0 0
      %1812 = vmatpush1.bf16.xpose.msra.mxu0 %v1787
      %1813 = vmatprep.subr.bf16.mxu0 0
      %1814 = vmatpush1.bf16.xpose.msra.mxu0 %v1786
      %1815 = vmatprep.subr.bf16.mxu0 0
      %1816 = vmatpush1.bf16.xpose.msra.mxu0 %v1785
      %1817 = vmatprep.subr.bf16.mxu0 0
      %1818 = vmatpush2.bf16.xpose.msra.mxu0 0
      %1819 = vmatprep.subr.bf16.mxu0 0
      %1820 = vmatpush2.bf16.xpose.msra.mxu0 0
      %1821 = vmatprep.subr.bf16.mxu0 0
      %1822 = vmatpush2.bf16.xpose.msra.mxu0 0
      %1823 = vmatprep.subr.bf16.mxu0 0
      %1824 = vmatpush2.bf16.xpose.msra.mxu0 0
      %1825 = vmatprep.subr.bf16.mxu0 0
      %1826 = vmatpush2.bf16.xpose.msra.mxu0 0
      %1827 = vmatprep.subr.bf16.mxu0 0
      %1828 = vmatpush2.bf16.xpose.msra.mxu0 0
      %1829 = vmatprep.subr.bf16.mxu0 0
      %1830 = vmatpush2.bf16.xpose.msra.mxu0 0
      %1831 = vmatprep.subr.bf16.mxu0 0
      %1832 = vmatpush2.bf16.xpose.msra.mxu0 0
      %1833 = vmatprep.mubr.bf16.mxu0 0
      %1834 = vmatmul.mubr.bf16.gmra.mxu0 %v1785
      %v1835 = vpop.f32.mrf.mxu0
      %v1836 = vadd.f32 0.0, %v1835
      %v1837 = vpop.f32.mrf.mxu0
      %v1838 = vpop.f32.mrf.mxu0
      %v1839 = vadd.f32 0.0, %v1838
      %v1840 = vpop.f32.mrf.mxu0
      %1841 = vmatprep.mubr.bf16.mxu0 0
      %1842 = vmatmul.mubr.bf16.gmra.mxu0 %v1786
      %v1843 = vpop.f32.mrf.mxu0
      %v1844 = vadd.f32 0.0, %v1843
      %v1845 = vpop.f32.mrf.mxu0
      %v1846 = vpop.f32.mrf.mxu0
      %v1847 = vadd.f32 0.0, %v1846
      %v1848 = vpop.f32.mrf.mxu0
      %1849 = vmatprep.mubr.bf16.mxu0 0
      %1850 = vmatmul.mubr.bf16.gmra.mxu0 %v1787
      %v1851 = vpop.f32.mrf.mxu0
      %v1852 = vadd.f32 0.0, %v1851
      %v1853 = vpop.f32.mrf.mxu0
      %v1854 = vpop.f32.mrf.mxu0
      %v1855 = vadd.f32 0.0, %v1854
      %v1856 = vpop.f32.mrf.mxu0
      %1857 = vmatprep.mubr.bf16.mxu0 0
      %1858 = vmatmul.mubr.bf16.gmra.mxu0 %v1788
      %v1859 = vpop.f32.mrf.mxu0
      %v1860 = vadd.f32 0.0, %v1859
      %v1861 = vpop.f32.mrf.mxu0
      %v1862 = vpop.f32.mrf.mxu0
      %v1863 = vadd.f32 0.0, %v1862
      %v1864 = vpop.f32.mrf.mxu0
      %1865 = vmatprep.mubr.bf16.mxu0 0
      %1866 = vmatmul.mubr.bf16.gmra.mxu0 %v1789
      %v1867 = vpop.f32.mrf.mxu0
      %v1868 = vadd.f32 0.0, %v1867
      %v1869 = vpop.f32.mrf.mxu0
      %v1870 = vpop.f32.mrf.mxu0
      %v1871 = vadd.f32 0.0, %v1870
      %v1872 = vpop.f32.mrf.mxu0
      %1873 = vmatprep.mubr.bf16.mxu0 0
      %1874 = vmatmul.mubr.bf16.gmra.mxu0 %v1790
      %v1875 = vpop.f32.mrf.mxu0
      %v1876 = vadd.f32 0.0, %v1875
      %v1877 = vpop.f32.mrf.mxu0
      %v1878 = vpop.f32.mrf.mxu0
      %v1879 = vadd.f32 0.0, %v1878
      %v1880 = vpop.f32.mrf.mxu0
      %1881 = vmatprep.mubr.bf16.mxu0 0
      %1882 = vmatmul.mubr.bf16.gmra.mxu0 %v1791
      %v1883 = vpop.f32.mrf.mxu0
      %v1884 = vadd.f32 0.0, %v1883
      %v1885 = vpop.f32.mrf.mxu0
      %v1886 = vpop.f32.mrf.mxu0
      %v1887 = vadd.f32 0.0, %v1886
      %v1888 = vpop.f32.mrf.mxu0
      %1889 = vmatprep.mubr.bf16.mxu0 0
      %1890 = vmatmul.mubr.bf16.gmra.mxu0 %v1792
      %v1891 = vpop.f32.mrf.mxu0
      %v1892 = vadd.f32 0.0, %v1891
      %v1893 = vpop.f32.mrf.mxu0
      %v1894 = vpop.f32.mrf.mxu0
      %v1895 = vadd.f32 0.0, %v1894
      %v1896 = vpop.f32.mrf.mxu0
      %1897 = vdwg.mxu0
      %v1898 = vmax.f32 %v1836, 0.0
      %v1899 = vmax.f32 %v1839, 0.0
      %v1900 = vmax.f32 %v1844, 0.0
      %v1901 = vmax.f32 %v1847, 0.0
      %v1902 = vmax.f32 %v1852, 0.0
      %v1903 = vmax.f32 %v1855, 0.0
      %v1904 = vmax.f32 %v1860, 0.0
      %v1905 = vmax.f32 %v1863, 0.0
      %v1906 = vmax.f32 %v1868, 0.0
      %v1907 = vmax.f32 %v1871, 0.0
      %v1908 = vmax.f32 %v1876, 0.0
      %v1909 = vmax.f32 %v1879, 0.0
      %v1910 = vmax.f32 %v1884, 0.0
      %v1911 = vmax.f32 %v1887, 0.0
      %v1912 = vmax.f32 %v1892, 0.0
      %v1913 = vmax.f32 %v1895, 0.0
      %v1914 = vmul.f32 %v1705, %v1705
      %v1915 = vmul.f32 %v1706, %v1706
      %v1916 = vmul.f32 %v1707, %v1707
      %v1917 = vmul.f32 %v1708, %v1708
      %v1918 = vmul.f32 %v1709, %v1709
      %v1919 = vmul.f32 %v1710, %v1710
      %v1920 = vmul.f32 %v1711, %v1711
      %v1921 = vmul.f32 %v1712, %v1712
      %v1922 = vmul.f32 %v1713, %v1713
      %v1923 = vmul.f32 %v1714, %v1714
      %v1924 = vmul.f32 %v1715, %v1715
      %v1925 = vmul.f32 %v1716, %v1716
      %v1926 = vmul.f32 %v1717, %v1717
      %v1927 = vmul.f32 %v1718, %v1718
      %v1928 = vmul.f32 %v1719, %v1719
      %v1929 = vmul.f32 %v1720, %v1720
      %1930 = vadd.xlane.f32.xlu0 %v1914
      %v1931 = vpop.xlane.xlu0 %1930
      %1932 = vadd.xlane.f32.xlu0 %v1915
      %v1933 = vpop.xlane.xlu0 %1932
      %1934 = vadd.xlane.f32.xlu0 %v1916
      %v1935 = vpop.xlane.xlu0 %1934
      %1936 = vadd.xlane.f32.xlu0 %v1917
      %v1937 = vpop.xlane.xlu0 %1936
      %1938 = vadd.xlane.f32.xlu0 %v1918
      %v1939 = vpop.xlane.xlu0 %1938
      %1940 = vadd.xlane.f32.xlu0 %v1919
      %v1941 = vpop.xlane.xlu0 %1940
      %1942 = vadd.xlane.f32.xlu0 %v1920
      %v1943 = vpop.xlane.xlu0 %1942
      %1944 = vadd.xlane.f32.xlu0 %v1921
      %v1945 = vpop.xlane.xlu0 %1944
      %1946 = vadd.xlane.f32.xlu0 %v1922
      %v1947 = vpop.xlane.xlu0 %1946
      %1948 = vadd.xlane.f32.xlu0 %v1923
      %v1949 = vpop.xlane.xlu0 %1948
      %1950 = vadd.xlane.f32.xlu0 %v1924
      %v1951 = vpop.xlane.xlu0 %1950
      %1952 = vadd.xlane.f32.xlu0 %v1925
      %v1953 = vpop.xlane.xlu0 %1952
      %1954 = vadd.xlane.f32.xlu0 %v1926
      %v1955 = vpop.xlane.xlu0 %1954
      %1956 = vadd.xlane.f32.xlu0 %v1927
      %v1957 = vpop.xlane.xlu0 %1956
      %1958 = vadd.xlane.f32.xlu0 %v1928
      %v1959 = vpop.xlane.xlu0 %1958
      %1960 = vadd.xlane.f32.xlu0 %v1929
      %v1961 = vpop.xlane.xlu0 %1960
      %vm1962 = vcmask 7168
      %v1963 = vsel %vm1962, %v1931, 0.0
      %v1964 = vsel %vm1962, %v1933, 0.0
      %v1965 = vadd.f32 %v1963, %v1964
      %v1966 = vsel %vm1962, %v1935, 0.0
      %v1967 = vadd.f32 %v1965, %v1966
      %v1968 = vsel %vm1962, %v1937, 0.0
      %v1969 = vadd.f32 %v1967, %v1968
      %v1970 = vsel %vm1962, %v1939, 0.0
      %v1971 = vadd.f32 %v1969, %v1970
      %v1972 = vsel %vm1962, %v1941, 0.0
      %v1973 = vadd.f32 %v1971, %v1972
      %v1974 = vsel %vm1962, %v1943, 0.0
      %v1975 = vadd.f32 %v1973, %v1974
      %v1976 = vsel %vm1962, %v1945, 0.0
      %v1977 = vadd.f32 %v1975, %v1976
      %v1978 = vsel %vm1962, %v1947, 0.0
      %v1979 = vadd.f32 %v1977, %v1978
      %v1980 = vsel %vm1962, %v1949, 0.0
      %v1981 = vadd.f32 %v1979, %v1980
      %v1982 = vsel %vm1962, %v1951, 0.0
      %v1983 = vadd.f32 %v1981, %v1982
      %v1984 = vsel %vm1962, %v1953, 0.0
      %v1985 = vadd.f32 %v1983, %v1984
      %v1986 = vsel %vm1962, %v1955, 0.0
      %v1987 = vadd.f32 %v1985, %v1986
      %v1988 = vsel %vm1962, %v1957, 0.0
      %v1989 = vadd.f32 %v1987, %v1988
      %v1990 = vsel %vm1962, %v1959, 0.0
      %v1991 = vadd.f32 %v1989, %v1990
      %v1992 = vsel %vm1962, %v1961, 0.0
      %v1993 = vadd.f32 %v1991, %v1992
      %1994 = vadd.xlane.f32.xlu0 %v1993
      %v1995 = vpop.xlane.xlu0 %1994
      %v1996 = vrot.slane %v1995, 4
      %v1997 = vadd.f32 %v1995, %v1996
      %v1998 = vrot.slane %v1997, 2
      %v1999 = vadd.f32 %v1997, %v1998
      %v2000 = vrot.slane %v1999, 1
      %v2001 = vadd.f32 %v1999, %v2000
      %s2002 = vtos %v2001
      %v2003 = vrcp.pop 128.0
      %s2004 = vtos %v2003
      %s2005 = smul.f32 %s2002, %s2004
      %s2006 = sadd.f32 %s2005, 1e-06
      %v2007 = vstv %s2006
      %v2008 = vrcp.pop %v2007
      %s2009 = vtos %v2008
      %s2010 = sadd.f32 %s2009, 1.0
      %v2011 = vstv %s2010
      %v2012 = vrsqrt.pop %v2011
      %v2013 = vmul.f32 %v2011, %v2012
      %vm2014 = vcmp.eq.f32.partialorder %v2011, inf
      %v2015 = vsel %vm2014, %v2011, %v2013
      %vm2016 = vcmp.eq.f32.partialorder %v2011, 0.0
      %v2017 = vand.u32 %v2011, 2147483648
      %v2018 = vsel %vm2016, %v2017, %v2015
      %s2019 = vtos %v2018
      %v2020 = vstv %s2019
      %v2021 = vmul.f32 %v2020, %v1931
      %v2022 = vmul.f32 %v2020, %v1933
      %v2023 = vmul.f32 %v2020, %v1935
      %v2024 = vmul.f32 %v2020, %v1937
      %v2025 = vmul.f32 %v2020, %v1939
      %v2026 = vmul.f32 %v2020, %v1941
      %v2027 = vmul.f32 %v2020, %v1943
      %v2028 = vmul.f32 %v2020, %v1945
      %v2029 = vmul.f32 %v2020, %v1947
      %v2030 = vmul.f32 %v2020, %v1949
      %v2031 = vmul.f32 %v2020, %v1951
      %v2032 = vmul.f32 %v2020, %v1953
      %v2033 = vmul.f32 %v2020, %v1955
      %v2034 = vmul.f32 %v2020, %v1957
      %v2035 = vmul.f32 %v2020, %v1959
      %v2036 = vmul.f32 %v2020, %v1961
      %v2037 = vadd.f32 %v2021, 1.0
      %v2038 = vadd.f32 %v2022, 1.0
      %v2039 = vadd.f32 %v2023, 1.0
      %v2040 = vadd.f32 %v2024, 1.0
      %v2041 = vadd.f32 %v2025, 1.0
      %v2042 = vadd.f32 %v2026, 1.0
      %v2043 = vadd.f32 %v2027, 1.0
      %v2044 = vadd.f32 %v2028, 1.0
      %v2045 = vadd.f32 %v2029, 1.0
      %v2046 = vadd.f32 %v2030, 1.0
      %v2047 = vadd.f32 %v2031, 1.0
      %v2048 = vadd.f32 %v2032, 1.0
      %v2049 = vadd.f32 %v2033, 1.0
      %v2050 = vadd.f32 %v2034, 1.0
      %v2051 = vadd.f32 %v2035, 1.0
      %v2052 = vadd.f32 %v2036, 1.0
      %v2053 = vmul.f32 %v1673, %v2037
      %v2054 = vmul.f32 %v1674, %v2038
      %v2055 = vmul.f32 %v1675, %v2039
      %v2056 = vmul.f32 %v1676, %v2040
      %v2057 = vmul.f32 %v1677, %v2041
      %v2058 = vmul.f32 %v1678, %v2042
      %v2059 = vmul.f32 %v1679, %v2043
      %v2060 = vmul.f32 %v1680, %v2044
      %v2061 = vmul.f32 %v1681, %v2045
      %v2062 = vmul.f32 %v1682, %v2046
      %v2063 = vmul.f32 %v1683, %v2047
      %v2064 = vmul.f32 %v1684, %v2048
      %v2065 = vmul.f32 %v1685, %v2049
      %v2066 = vmul.f32 %v1686, %v2050
      %v2067 = vmul.f32 %v1687, %v2051
      %v2068 = vmul.f32 %v1688, %v2052
      %v2069 = vadd.f32 %v1898, %v2053
      %v2070 = vadd.f32 %v1899, %v2054
      %v2071 = vadd.f32 %v1900, %v2055
      %v2072 = vadd.f32 %v1901, %v2056
      %v2073 = vadd.f32 %v1902, %v2057
      %v2074 = vadd.f32 %v1903, %v2058
      %v2075 = vadd.f32 %v1904, %v2059
      %v2076 = vadd.f32 %v1905, %v2060
      %v2077 = vadd.f32 %v1906, %v2061
      %v2078 = vadd.f32 %v1907, %v2062
      %v2079 = vadd.f32 %v1908, %v2063
      %v2080 = vadd.f32 %v1909, %v2064
      %v2081 = vadd.f32 %v1910, %v2065
      %v2082 = vadd.f32 %v1911, %v2066
      %v2083 = vadd.f32 %v1912, %v2067
      %v2084 = vadd.f32 %v1913, %v2068
      %2085 = vadd.xlane.f32.xlu0 %v2069
      %v2086 = vpop.xlane.xlu0 %2085
      %2087 = vadd.xlane.f32.xlu0 %v2070
      %v2088 = vpop.xlane.xlu0 %2087
      %2089 = vadd.xlane.f32.xlu0 %v2071
      %v2090 = vpop.xlane.xlu0 %2089
      %2091 = vadd.xlane.f32.xlu0 %v2072
      %v2092 = vpop.xlane.xlu0 %2091
      %2093 = vadd.xlane.f32.xlu0 %v2073
      %v2094 = vpop.xlane.xlu0 %2093
      %2095 = vadd.xlane.f32.xlu0 %v2074
      %v2096 = vpop.xlane.xlu0 %2095
      %2097 = vadd.xlane.f32.xlu0 %v2075
      %v2098 = vpop.xlane.xlu0 %2097
      %2099 = vadd.xlane.f32.xlu0 %v2076
      %v2100 = vpop.xlane.xlu0 %2099
      %2101 = vadd.xlane.f32.xlu0 %v2077
      %v2102 = vpop.xlane.xlu0 %2101
      %2103 = vadd.xlane.f32.xlu0 %v2078
      %v2104 = vpop.xlane.xlu0 %2103
      %2105 = vadd.xlane.f32.xlu0 %v2079
      %v2106 = vpop.xlane.xlu0 %2105
      %2107 = vadd.xlane.f32.xlu0 %v2080
      %v2108 = vpop.xlane.xlu0 %2107
      %2109 = vadd.xlane.f32.xlu0 %v2081
      %v2110 = vpop.xlane.xlu0 %2109
      %2111 = vadd.xlane.f32.xlu0 %v2082
      %v2112 = vpop.xlane.xlu0 %2111
      %2113 = vadd.xlane.f32.xlu0 %v2083
      %v2114 = vpop.xlane.xlu0 %2113
      %2115 = vadd.xlane.f32.xlu0 %v2084
      %v2116 = vpop.xlane.xlu0 %2115
      %v2117 = vrsqrt.pop %v2086
      %v2118 = vrsqrt.pop %v2088
      %v2119 = vrsqrt.pop %v2090
      %v2120 = vrsqrt.pop %v2092
      %v2121 = vrsqrt.pop %v2094
      %v2122 = vrsqrt.pop %v2096
      %v2123 = vrsqrt.pop %v2098
      %v2124 = vrsqrt.pop %v2100
      %v2125 = vrsqrt.pop %v2102
      %v2126 = vrsqrt.pop %v2104
      %v2127 = vrsqrt.pop %v2106
      %v2128 = vrsqrt.pop %v2108
      %v2129 = vrsqrt.pop %v2110
      %v2130 = vrsqrt.pop %v2112
      %v2131 = vrsqrt.pop %v2114
      %v2132 = vrsqrt.pop %v2116
      %v2133 = vpack.c.bf16 %v2070, %v2069
      %v2134 = vpack.c.bf16 %v2072, %v2071
      %v2135 = vpack.c.bf16 %v2074, %v2073
      %v2136 = vpack.c.bf16 %v2076, %v2075
      %v2137 = vpack.c.bf16 %v2078, %v2077
      %v2138 = vpack.c.bf16 %v2080, %v2079
      %v2139 = vpack.c.bf16 %v2082, %v2081
      %v2140 = vpack.c.bf16 %v2084, %v2083
      %v2141 = vmul.f32 %v2117, %v1542
      %v2142 = vmul.f32 %v2118, %v1545
      %v2143 = vmul.f32 %v2119, %v1550
      %v2144 = vmul.f32 %v2120, %v1553
      %v2145 = vmul.f32 %v2121, %v1558
      %v2146 = vmul.f32 %v2122, %v1561
      %v2147 = vmul.f32 %v2123, %v1566
      %v2148 = vmul.f32 %v2124, %v1569
      %v2149 = vmul.f32 %v2125, %v1574
      %v2150 = vmul.f32 %v2126, %v1577
      %v2151 = vmul.f32 %v2127, %v1582
      %v2152 = vmul.f32 %v2128, %v1585
      %v2153 = vmul.f32 %v2129, %v1590
      %v2154 = vmul.f32 %v2130, %v1593
      %v2155 = vmul.f32 %v2131, %v1598
      %v2156 = vmul.f32 %v2132, %v1601
      %v2157 = vpack.c.bf16 %v2142, %v2141
      %v2158 = vpack.c.bf16 %v2144, %v2143
      %v2159 = vpack.c.bf16 %v2146, %v2145
      %v2160 = vpack.c.bf16 %v2148, %v2147
      %v2161 = vpack.c.bf16 %v2150, %v2149
      %v2162 = vpack.c.bf16 %v2152, %v2151
      %v2163 = vpack.c.bf16 %v2154, %v2153
      %v2164 = vpack.c.bf16 %v2156, %v2155
      %2165 = vmatprep.subr.bf16.mxu0 0
      %2166 = vmatpush1.bf16.msra.mxu0 %v2164
      %2167 = vmatprep.subr.bf16.mxu0 0
      %2168 = vmatpush1.bf16.msra.mxu0 %v2163
      %2169 = vmatprep.subr.bf16.mxu0 0
      %2170 = vmatpush1.bf16.msra.mxu0 %v2162
      %2171 = vmatprep.subr.bf16.mxu0 0
      %2172 = vmatpush1.bf16.msra.mxu0 %v2161
      %2173 = vmatprep.subr.bf16.mxu0 0
      %2174 = vmatpush1.bf16.msra.mxu0 %v2160
      %2175 = vmatprep.subr.bf16.mxu0 0
      %2176 = vmatpush1.bf16.msra.mxu0 %v2159
      %2177 = vmatprep.subr.bf16.mxu0 0
      %2178 = vmatpush1.bf16.msra.mxu0 %v2158
      %2179 = vmatprep.subr.bf16.mxu0 0
      %2180 = vmatpush1.bf16.msra.mxu0 %v2157
      %2181 = vmatprep.subr.bf16.mxu0 0
      %2182 = vmatpush2.bf16.msra.mxu0 0
      %2183 = vmatprep.subr.bf16.mxu0 0
      %2184 = vmatpush2.bf16.msra.mxu0 0
      %2185 = vmatprep.subr.bf16.mxu0 0
      %2186 = vmatpush2.bf16.msra.mxu0 0
      %2187 = vmatprep.subr.bf16.mxu0 0
      %2188 = vmatpush2.bf16.msra.mxu0 0
      %2189 = vmatprep.subr.bf16.mxu0 0
      %2190 = vmatpush2.bf16.msra.mxu0 0
      %2191 = vmatprep.subr.bf16.mxu0 0
      %2192 = vmatpush2.bf16.msra.mxu0 0
      %2193 = vmatprep.subr.bf16.mxu0 0
      %2194 = vmatpush2.bf16.msra.mxu0 0
      %2195 = vmatprep.subr.bf16.mxu0 0
      %2196 = vmatpush2.bf16.msra.mxu0 0
      %2197 = vmatprep.mubr.bf16.mxu0 0
      %2198 = vmatmul.mubr.bf16.gmra.mxu0 %v2133
      %v2199 = vpop.f32.mrf.mxu0
      %v2200 = vadd.f32 0.0, %v2199
      %v2201 = vpop.f32.mrf.mxu0
      %v2202 = vpop.f32.mrf.mxu0
      %v2203 = vadd.f32 0.0, %v2202
      %v2204 = vpop.f32.mrf.mxu0
      %2205 = vmatprep.mubr.bf16.mxu0 0
      %2206 = vmatmul.mubr.bf16.gmra.mxu0 %v2134
      %v2207 = vpop.f32.mrf.mxu0
      %v2208 = vadd.f32 0.0, %v2207
      %v2209 = vpop.f32.mrf.mxu0
      %v2210 = vpop.f32.mrf.mxu0
      %v2211 = vadd.f32 0.0, %v2210
      %v2212 = vpop.f32.mrf.mxu0
      %2213 = vmatprep.mubr.bf16.mxu0 0
      %2214 = vmatmul.mubr.bf16.gmra.mxu0 %v2135
      %v2215 = vpop.f32.mrf.mxu0
      %v2216 = vadd.f32 0.0, %v2215
      %v2217 = vpop.f32.mrf.mxu0
      %v2218 = vpop.f32.mrf.mxu0
      %v2219 = vadd.f32 0.0, %v2218
      %v2220 = vpop.f32.mrf.mxu0
      %2221 = vmatprep.mubr.bf16.mxu0 0
      %2222 = vmatmul.mubr.bf16.gmra.mxu0 %v2136
      %v2223 = vpop.f32.mrf.mxu0
      %v2224 = vadd.f32 0.0, %v2223
      %v2225 = vpop.f32.mrf.mxu0
      %v2226 = vpop.f32.mrf.mxu0
      %v2227 = vadd.f32 0.0, %v2226
      %v2228 = vpop.f32.mrf.mxu0
      %2229 = vmatprep.mubr.bf16.mxu0 0
      %2230 = vmatmul.mubr.bf16.gmra.mxu0 %v2137
      %v2231 = vpop.f32.mrf.mxu0
      %v2232 = vadd.f32 0.0, %v2231
      %v2233 = vpop.f32.mrf.mxu0
      %v2234 = vpop.f32.mrf.mxu0
      %v2235 = vadd.f32 0.0, %v2234
      %v2236 = vpop.f32.mrf.mxu0
      %2237 = vmatprep.mubr.bf16.mxu0 0
      %2238 = vmatmul.mubr.bf16.gmra.mxu0 %v2138
      %v2239 = vpop.f32.mrf.mxu0
      %v2240 = vadd.f32 0.0, %v2239
      %v2241 = vpop.f32.mrf.mxu0
      %v2242 = vpop.f32.mrf.mxu0
      %v2243 = vadd.f32 0.0, %v2242
      %v2244 = vpop.f32.mrf.mxu0
      %2245 = vmatprep.mubr.bf16.mxu0 0
      %2246 = vmatmul.mubr.bf16.gmra.mxu0 %v2139
      %v2247 = vpop.f32.mrf.mxu0
      %v2248 = vadd.f32 0.0, %v2247
      %v2249 = vpop.f32.mrf.mxu0
      %v2250 = vpop.f32.mrf.mxu0
      %v2251 = vadd.f32 0.0, %v2250
      %v2252 = vpop.f32.mrf.mxu0
      %2253 = vmatprep.mubr.bf16.mxu0 0
      %2254 = vmatmul.mubr.bf16.gmra.mxu0 %v2140
      %v2255 = vpop.f32.mrf.mxu0
      %v2256 = vadd.f32 0.0, %v2255
      %v2257 = vpop.f32.mrf.mxu0
      %v2258 = vpop.f32.mrf.mxu0
      %v2259 = vadd.f32 0.0, %v2258
      %v2260 = vpop.f32.mrf.mxu0
      %2261 = vdwg.mxu0
      %v2262 = vmul.f32 %v2117, %v2200
      %v2263 = vmul.f32 %v2118, %v2203
      %v2264 = vmul.f32 %v2119, %v2208
      %v2265 = vmul.f32 %v2120, %v2211
      %v2266 = vmul.f32 %v2121, %v2216
      %v2267 = vmul.f32 %v2122, %v2219
      %v2268 = vmul.f32 %v2123, %v2224
      %v2269 = vmul.f32 %v2124, %v2227
      %v2270 = vmul.f32 %v2125, %v2232
      %v2271 = vmul.f32 %v2126, %v2235
      %v2272 = vmul.f32 %v2127, %v2240
      %v2273 = vmul.f32 %v2128, %v2243
      %v2274 = vmul.f32 %v2129, %v2248
      %v2275 = vmul.f32 %v2130, %v2251
      %v2276 = vmul.f32 %v2131, %v2256
      %v2277 = vmul.f32 %v2132, %v2259
      %v2279 = vlaneseq
      %v2280 = vshrl.u32 %v2279, 7
      %v2281 = vsub.s32 0, %v2280
      %v2282 = vrot.slane %v1620, %v2281
      %v2284 = vadd.f32 %v2262, %v2282
      %v2285 = vadd.f32 %v2263, %v2282
      %v2286 = vadd.f32 %v2264, %v2282
      %v2287 = vadd.f32 %v2265, %v2282
      %v2288 = vadd.f32 %v2266, %v2282
      %v2289 = vadd.f32 %v2267, %v2282
      %v2290 = vadd.f32 %v2268, %v2282
      %v2291 = vadd.f32 %v2269, %v2282
      %v2292 = vadd.f32 %v2270, %v2282
      %v2293 = vadd.f32 %v2271, %v2282
      %v2294 = vadd.f32 %v2272, %v2282
      %v2295 = vadd.f32 %v2273, %v2282
      %v2296 = vadd.f32 %v2274, %v2282
      %v2297 = vadd.f32 %v2275, %v2282
      %v2298 = vadd.f32 %v2276, %v2282
      %v2299 = vadd.f32 %v2277, %v2282
      %v2300 = vmax.f32 %v2284, 0.0
      %v2301 = vmax.f32 %v2285, 0.0
      %v2302 = vmax.f32 %v2286, 0.0
      %v2303 = vmax.f32 %v2287, 0.0
      %v2304 = vmax.f32 %v2288, 0.0
      %v2305 = vmax.f32 %v2289, 0.0
      %v2306 = vmax.f32 %v2290, 0.0
      %v2307 = vmax.f32 %v2291, 0.0
      %v2308 = vmax.f32 %v2292, 0.0
      %v2309 = vmax.f32 %v2293, 0.0
      %v2310 = vmax.f32 %v2294, 0.0
      %v2311 = vmax.f32 %v2295, 0.0
      %v2312 = vmax.f32 %v2296, 0.0
      %v2313 = vmax.f32 %v2297, 0.0
      %v2314 = vmax.f32 %v2298, 0.0
      %v2315 = vmax.f32 %v2299, 0.0
      %v2316 = vmul.f32 %v2117, %v2300
      %v2317 = vmul.f32 %v2118, %v2301
      %v2318 = vmul.f32 %v2119, %v2302
      %v2319 = vmul.f32 %v2120, %v2303
      %v2320 = vmul.f32 %v2121, %v2304
      %v2321 = vmul.f32 %v2122, %v2305
      %v2322 = vmul.f32 %v2123, %v2306
      %v2323 = vmul.f32 %v2124, %v2307
      %v2324 = vmul.f32 %v2125, %v2308
      %v2325 = vmul.f32 %v2126, %v2309
      %v2326 = vmul.f32 %v2127, %v2310
      %v2327 = vmul.f32 %v2128, %v2311
      %v2328 = vmul.f32 %v2129, %v2312
      %v2329 = vmul.f32 %v2130, %v2313
      %v2330 = vmul.f32 %v2131, %v2314
      %v2331 = vmul.f32 %v2132, %v2315
      %v2332 = vpack.c.bf16 %v2317, %v2316
      %v2333 = vpack.c.bf16 %v2319, %v2318
      %v2334 = vpack.c.bf16 %v2321, %v2320
      %v2335 = vpack.c.bf16 %v2323, %v2322
      %v2336 = vpack.c.bf16 %v2325, %v2324
      %v2337 = vpack.c.bf16 %v2327, %v2326
      %v2338 = vpack.c.bf16 %v2329, %v2328
      %v2339 = vpack.c.bf16 %v2331, %v2330
      %2340 = vmatprep.subr.bf16.mxu0 0
      %2341 = vmatpush1.bf16.msra.mxu0 %v2339
      %2342 = vmatprep.subr.bf16.mxu0 0
      %2343 = vmatpush1.bf16.msra.mxu0 %v2338
      %2344 = vmatprep.subr.bf16.mxu0 0
      %2345 = vmatpush1.bf16.msra.mxu0 %v2337
      %2346 = vmatprep.subr.bf16.mxu0 0
      %2347 = vmatpush1.bf16.msra.mxu0 %v2336
      %2348 = vmatprep.subr.bf16.mxu0 0
      %2349 = vmatpush1.bf16.msra.mxu0 %v2335
      %2350 = vmatprep.subr.bf16.mxu0 0
      %2351 = vmatpush1.bf16.msra.mxu0 %v2334
      %2352 = vmatprep.subr.bf16.mxu0 0
      %2353 = vmatpush1.bf16.msra.mxu0 %v2333
      %2354 = vmatprep.subr.bf16.mxu0 0
      %2355 = vmatpush1.bf16.msra.mxu0 %v2332
      %2356 = vmatprep.subr.bf16.mxu0 0
      %2357 = vmatpush2.bf16.msra.mxu0 0
      %2358 = vmatprep.subr.bf16.mxu0 0
      %2359 = vmatpush2.bf16.msra.mxu0 0
      %2360 = vmatprep.subr.bf16.mxu0 0
      %2361 = vmatpush2.bf16.msra.mxu0 0
      %2362 = vmatprep.subr.bf16.mxu0 0
      %2363 = vmatpush2.bf16.msra.mxu0 0
      %2364 = vmatprep.subr.bf16.mxu0 0
      %2365 = vmatpush2.bf16.msra.mxu0 0
      %2366 = vmatprep.subr.bf16.mxu0 0
      %2367 = vmatpush2.bf16.msra.mxu0 0
      %2368 = vmatprep.subr.bf16.mxu0 0
      %2369 = vmatpush2.bf16.msra.mxu0 0
      %2370 = vmatprep.subr.bf16.mxu0 0
      %2371 = vmatpush2.bf16.msra.mxu0 0
      %2372 = vmatprep.mubr.bf16.mxu0 0
      %2373 = vmatmul.mubr.bf16.gmra.mxu0 %v2133
      %v2374 = vpop.f32.mrf.mxu0
      %v2375 = vadd.f32 0.0, %v2374
      %v2376 = vpop.f32.mrf.mxu0
      %v2377 = vpop.f32.mrf.mxu0
      %v2378 = vadd.f32 0.0, %v2377
      %v2379 = vpop.f32.mrf.mxu0
      %2380 = vmatprep.mubr.bf16.mxu0 0
      %2381 = vmatmul.mubr.bf16.gmra.mxu0 %v2134
      %v2382 = vpop.f32.mrf.mxu0
      %v2383 = vadd.f32 0.0, %v2382
      %v2384 = vpop.f32.mrf.mxu0
      %v2385 = vpop.f32.mrf.mxu0
      %v2386 = vadd.f32 0.0, %v2385
      %v2387 = vpop.f32.mrf.mxu0
      %2388 = vmatprep.mubr.bf16.mxu0 0
      %2389 = vmatmul.mubr.bf16.gmra.mxu0 %v2135
      %v2390 = vpop.f32.mrf.mxu0
      %v2391 = vadd.f32 0.0, %v2390
      %v2392 = vpop.f32.mrf.mxu0
      %v2393 = vpop.f32.mrf.mxu0
      %v2394 = vadd.f32 0.0, %v2393
      %v2395 = vpop.f32.mrf.mxu0
      %2396 = vmatprep.mubr.bf16.mxu0 0
      %2397 = vmatmul.mubr.bf16.gmra.mxu0 %v2136
      %v2398 = vpop.f32.mrf.mxu0
      %v2399 = vadd.f32 0.0, %v2398
      %v2400 = vpop.f32.mrf.mxu0
      %v2401 = vpop.f32.mrf.mxu0
      %v2402 = vadd.f32 0.0, %v2401
      %v2403 = vpop.f32.mrf.mxu0
      %2404 = vmatprep.mubr.bf16.mxu0 0
      %2405 = vmatmul.mubr.bf16.gmra.mxu0 %v2137
      %v2406 = vpop.f32.mrf.mxu0
      %v2407 = vadd.f32 0.0, %v2406
      %v2408 = vpop.f32.mrf.mxu0
      %v2409 = vpop.f32.mrf.mxu0
      %v2410 = vadd.f32 0.0, %v2409
      %v2411 = vpop.f32.mrf.mxu0
      %2412 = vmatprep.mubr.bf16.mxu0 0
      %2413 = vmatmul.mubr.bf16.gmra.mxu0 %v2138
      %v2414 = vpop.f32.mrf.mxu0
      %v2415 = vadd.f32 0.0, %v2414
      %v2416 = vpop.f32.mrf.mxu0
      %v2417 = vpop.f32.mrf.mxu0
      %v2418 = vadd.f32 0.0, %v2417
      %v2419 = vpop.f32.mrf.mxu0
      %2420 = vmatprep.mubr.bf16.mxu0 0
      %2421 = vmatmul.mubr.bf16.gmra.mxu0 %v2139
      %v2422 = vpop.f32.mrf.mxu0
      %v2423 = vadd.f32 0.0, %v2422
      %v2424 = vpop.f32.mrf.mxu0
      %v2425 = vpop.f32.mrf.mxu0
      %v2426 = vadd.f32 0.0, %v2425
      %v2427 = vpop.f32.mrf.mxu0
      %2428 = vmatprep.mubr.bf16.mxu0 0
      %2429 = vmatmul.mubr.bf16.gmra.mxu0 %v2140
      %v2430 = vpop.f32.mrf.mxu0
      %v2431 = vadd.f32 0.0, %v2430
      %v2432 = vpop.f32.mrf.mxu0
      %v2433 = vpop.f32.mrf.mxu0
      %v2434 = vadd.f32 0.0, %v2433
      %v2435 = vpop.f32.mrf.mxu0
      %2436 = vdwg.mxu0
      %v2437 = vmul.f32 %v2117, %v2375
      %v2438 = vmul.f32 %v2118, %v2378
      %v2439 = vmul.f32 %v2119, %v2383
      %v2440 = vmul.f32 %v2120, %v2386
      %v2441 = vmul.f32 %v2121, %v2391
      %v2442 = vmul.f32 %v2122, %v2394
      %v2443 = vmul.f32 %v2123, %v2399
      %v2444 = vmul.f32 %v2124, %v2402
      %v2445 = vmul.f32 %v2125, %v2407
      %v2446 = vmul.f32 %v2126, %v2410
      %v2447 = vmul.f32 %v2127, %v2415
      %v2448 = vmul.f32 %v2128, %v2418
      %v2449 = vmul.f32 %v2129, %v2423
      %v2450 = vmul.f32 %v2130, %v2426
      %v2451 = vmul.f32 %v2131, %v2431
      %v2452 = vmul.f32 %v2132, %v2434
      %v2453 = vpack.c.bf16 %v2438, %v2437
      %v2454 = vpack.c.bf16 %v2440, %v2439
      %v2455 = vpack.c.bf16 %v2442, %v2441
      %v2456 = vpack.c.bf16 %v2444, %v2443
      %v2457 = vpack.c.bf16 %v2446, %v2445
      %v2458 = vpack.c.bf16 %v2448, %v2447
      %v2459 = vpack.c.bf16 %v2450, %v2449
      %v2460 = vpack.c.bf16 %v2452, %v2451
      %v2461 = vmul.f32 %v2020, %v1705
      %v2462 = vmul.f32 %v2020, %v1706
      %v2463 = vmul.f32 %v2020, %v1707
      %v2464 = vmul.f32 %v2020, %v1708
      %v2465 = vmul.f32 %v2020, %v1709
      %v2466 = vmul.f32 %v2020, %v1710
      %v2467 = vmul.f32 %v2020, %v1711
      %v2468 = vmul.f32 %v2020, %v1712
      %v2469 = vmul.f32 %v2020, %v1713
      %v2470 = vmul.f32 %v2020, %v1714
      %v2471 = vmul.f32 %v2020, %v1715
      %v2472 = vmul.f32 %v2020, %v1716
      %v2473 = vmul.f32 %v2020, %v1717
      %v2474 = vmul.f32 %v2020, %v1718
      %v2475 = vmul.f32 %v2020, %v1719
      %v2476 = vmul.f32 %v2020, %v1720
      %v2477 = vsub.f32 1.0, %v1737
      %v2478 = vsub.f32 1.0, %v1738
      %v2479 = vsub.f32 1.0, %v1739
      %v2480 = vsub.f32 1.0, %v1740
      %v2481 = vsub.f32 1.0, %v1741
      %v2482 = vsub.f32 1.0, %v1742
      %v2483 = vsub.f32 1.0, %v1743
      %v2484 = vsub.f32 1.0, %v1744
      %v2485 = vsub.f32 1.0, %v1745
      %v2486 = vsub.f32 1.0, %v1746
      %v2487 = vsub.f32 1.0, %v1747
      %v2488 = vsub.f32 1.0, %v1748
      %v2489 = vsub.f32 1.0, %v1749
      %v2490 = vsub.f32 1.0, %v1750
      %v2491 = vsub.f32 1.0, %v1751
      %v2492 = vsub.f32 1.0, %v1752
      %v2493 = vmul.f32 %v2461, %v2477
      %v2494 = vmul.f32 %v2462, %v2478
      %v2495 = vmul.f32 %v2463, %v2479
      %v2496 = vmul.f32 %v2464, %v2480
      %v2497 = vmul.f32 %v2465, %v2481
      %v2498 = vmul.f32 %v2466, %v2482
      %v2499 = vmul.f32 %v2467, %v2483
      %v2500 = vmul.f32 %v2468, %v2484
      %v2501 = vmul.f32 %v2469, %v2485
      %v2502 = vmul.f32 %v2470, %v2486
      %v2503 = vmul.f32 %v2471, %v2487
      %v2504 = vmul.f32 %v2472, %v2488
      %v2505 = vmul.f32 %v2473, %v2489
      %v2506 = vmul.f32 %v2474, %v2490
      %v2507 = vmul.f32 %v2475, %v2491
      %v2508 = vmul.f32 %v2476, %v2492
      %v2510 = vlaneseq
      %v2511 = vshrl.u32 %v2510, 7
      %v2512 = vsub.s32 0, %v2511
      %v2513 = vrot.slane %v1621, %v2512
      %v2531 = vunpack.c.l.b16 %v1604
      %v2532 = vunpack.c.l.b16 %v1605
      %v2533 = vunpack.c.l.b16 %v1606
      %v2534 = vunpack.c.l.b16 %v1607
      %v2535 = vunpack.c.l.b16 %v1608
      %v2536 = vunpack.c.l.b16 %v1609
      %v2537 = vunpack.c.l.b16 %v1610
      %v2538 = vunpack.c.l.b16 %v1611
      %v2539 = vunpack.c.l.b16 %v1612
      %v2540 = vunpack.c.l.b16 %v1613
      %v2541 = vunpack.c.l.b16 %v1614
      %v2542 = vunpack.c.l.b16 %v1615
      %v2543 = vunpack.c.l.b16 %v1616
      %v2544 = vunpack.c.l.b16 %v1617
      %v2545 = vunpack.c.l.b16 %v1618
      %v2546 = vunpack.c.l.b16 %v1619
      %v2547 = vpack.c.b16 %v2532, %v2531
      %v2548 = vpack.c.b16 %v2534, %v2533
      %v2549 = vpack.c.b16 %v2536, %v2535
      %v2550 = vpack.c.b16 %v2538, %v2537
      %v2551 = vpack.c.b16 %v2540, %v2539
      %v2552 = vpack.c.b16 %v2542, %v2541
      %v2553 = vpack.c.b16 %v2544, %v2543
      %v2554 = vpack.c.b16 %v2546, %v2545
      %2563 = vmatprep.subr.bf16.mxu0 0
      %2564 = vmatpush1.bf16.msra.mxu0 %v2554
      %2565 = vmatprep.subr.bf16.mxu0 0
      %2566 = vmatpush1.bf16.msra.mxu0 %v2553
      %2567 = vmatprep.subr.bf16.mxu0 0
      %2568 = vmatpush1.bf16.msra.mxu0 %v2552
      %2569 = vmatprep.subr.bf16.mxu0 0
      %2570 = vmatpush1.bf16.msra.mxu0 %v2551
      %2571 = vmatprep.subr.bf16.mxu0 0
      %2572 = vmatpush1.bf16.msra.mxu0 %v2550
      %2573 = vmatprep.subr.bf16.mxu0 0
      %2574 = vmatpush1.bf16.msra.mxu0 %v2549
      %2575 = vmatprep.subr.bf16.mxu0 0
      %2576 = vmatpush1.bf16.msra.mxu0 %v2548
      %2577 = vmatprep.subr.bf16.mxu0 0
      %2578 = vmatpush1.bf16.msra.mxu0 %v2547
      %2579 = vmatprep.subr.bf16.mxu0 0
      %2580 = vmatpush2.bf16.msra.mxu0 0
      %2581 = vmatprep.subr.bf16.mxu0 0
      %2582 = vmatpush2.bf16.msra.mxu0 0
      %2583 = vmatprep.subr.bf16.mxu0 0
      %2584 = vmatpush2.bf16.msra.mxu0 0
      %2585 = vmatprep.subr.bf16.mxu0 0
      %2586 = vmatpush2.bf16.msra.mxu0 0
      %2587 = vmatprep.subr.bf16.mxu0 0
      %2588 = vmatpush2.bf16.msra.mxu0 0
      %2589 = vmatprep.subr.bf16.mxu0 0
      %2590 = vmatpush2.bf16.msra.mxu0 0
      %2591 = vmatprep.subr.bf16.mxu0 0
      %2592 = vmatpush2.bf16.msra.mxu0 0
      %2593 = vmatprep.subr.bf16.mxu0 0
      %2594 = vmatpush2.bf16.msra.mxu0 0
      %2595 = vmatprep.mubr.bf16.mxu0 0
      %2596 = vmatmul.mubr.bf16.gmra.mxu0 %v2453
      %v2597 = vpop.f32.mrf.mxu0
      %v2598 = vadd.f32 %v2513, %v2597
      %v2599 = vpop.f32.mrf.mxu0
      %v2600 = vpop.f32.mrf.mxu0
      %v2601 = vadd.f32 %v2513, %v2600
      %v2602 = vpop.f32.mrf.mxu0
      %2603 = vmatprep.mubr.bf16.mxu0 0
      %2604 = vmatmul.mubr.bf16.gmra.mxu0 %v2454
      %v2605 = vpop.f32.mrf.mxu0
      %v2606 = vadd.f32 %v2513, %v2605
      %v2607 = vpop.f32.mrf.mxu0
      %v2608 = vpop.f32.mrf.mxu0
      %v2609 = vadd.f32 %v2513, %v2608
      %v2610 = vpop.f32.mrf.mxu0
      %2611 = vmatprep.mubr.bf16.mxu0 0
      %2612 = vmatmul.mubr.bf16.gmra.mxu0 %v2455
      %v2613 = vpop.f32.mrf.mxu0
      %v2614 = vadd.f32 %v2513, %v2613
      %v2615 = vpop.f32.mrf.mxu0
      %v2616 = vpop.f32.mrf.mxu0
      %v2617 = vadd.f32 %v2513, %v2616
      %v2618 = vpop.f32.mrf.mxu0
      %2619 = vmatprep.mubr.bf16.mxu0 0
      %2620 = vmatmul.mubr.bf16.gmra.mxu0 %v2456
      %v2621 = vpop.f32.mrf.mxu0
      %v2622 = vadd.f32 %v2513, %v2621
      %v2623 = vpop.f32.mrf.mxu0
      %v2624 = vpop.f32.mrf.mxu0
      %v2625 = vadd.f32 %v2513, %v2624
      %v2626 = vpop.f32.mrf.mxu0
      %2627 = vmatprep.mubr.bf16.mxu0 0
      %2628 = vmatmul.mubr.bf16.gmra.mxu0 %v2457
      %v2629 = vpop.f32.mrf.mxu0
      %v2630 = vadd.f32 %v2513, %v2629
      %v2631 = vpop.f32.mrf.mxu0
      %v2632 = vpop.f32.mrf.mxu0
      %v2633 = vadd.f32 %v2513, %v2632
      %v2634 = vpop.f32.mrf.mxu0
      %2635 = vmatprep.mubr.bf16.mxu0 0
      %2636 = vmatmul.mubr.bf16.gmra.mxu0 %v2458
      %v2637 = vpop.f32.mrf.mxu0
      %v2638 = vadd.f32 %v2513, %v2637
      %v2639 = vpop.f32.mrf.mxu0
      %v2640 = vpop.f32.mrf.mxu0
      %v2641 = vadd.f32 %v2513, %v2640
      %v2642 = vpop.f32.mrf.mxu0
      %2643 = vmatprep.mubr.bf16.mxu0 0
      %2644 = vmatmul.mubr.bf16.gmra.mxu0 %v2459
      %v2645 = vpop.f32.mrf.mxu0
      %v2646 = vadd.f32 %v2513, %v2645
      %v2647 = vpop.f32.mrf.mxu0
      %v2648 = vpop.f32.mrf.mxu0
      %v2649 = vadd.f32 %v2513, %v2648
      %v2650 = vpop.f32.mrf.mxu0
      %2651 = vmatprep.mubr.bf16.mxu0 0
      %2652 = vmatmul.mubr.bf16.gmra.mxu0 %v2460
      %v2653 = vpop.f32.mrf.mxu0
      %v2654 = vadd.f32 %v2513, %v2653
      %v2655 = vpop.f32.mrf.mxu0
      %v2656 = vpop.f32.mrf.mxu0
      %v2657 = vadd.f32 %v2513, %v2656
      %v2658 = vpop.f32.mrf.mxu0
      %2659 = vdwg.mxu0
      %v2660 = vadd.f32 %v2598, %v2493
      %v2661 = vadd.f32 %v2601, %v2494
      %v2662 = vadd.f32 %v2606, %v2495
      %v2663 = vadd.f32 %v2609, %v2496
      %v2664 = vadd.f32 %v2614, %v2497
      %v2665 = vadd.f32 %v2617, %v2498
      %v2666 = vadd.f32 %v2622, %v2499
      %v2667 = vadd.f32 %v2625, %v2500
      %v2668 = vadd.f32 %v2630, %v2501
      %v2669 = vadd.f32 %v2633, %v2502
      %v2670 = vadd.f32 %v2638, %v2503
      %v2671 = vadd.f32 %v2641, %v2504
      %v2672 = vadd.f32 %v2646, %v2505
      %v2673 = vadd.f32 %v2649, %v2506
      %v2674 = vadd.f32 %v2654, %v2507
      %v2675 = vadd.f32 %v2657, %v2508
      %2676 = vst [vmem:[%s318] sm:$0xff] %v2660
      %2677 = vst [vmem:[%s318 + $0x8] sm:$0xff] %v2661
      %2678 = vst [vmem:[%s318 + $0x10] sm:$0xff] %v2662
      %2679 = vst [vmem:[%s318 + $0x18] sm:$0xff] %v2663
      %2680 = vst [vmem:[%s318 + $0x20] sm:$0xff] %v2664
      %2681 = vst [vmem:[%s318 + $0x28] sm:$0xff] %v2665
      %2682 = vst [vmem:[%s318 + $0x30] sm:$0xff] %v2666
      %2683 = vst [vmem:[%s318 + $0x38] sm:$0xff] %v2667
      %2684 = vst [vmem:[%s318 + $0x40] sm:$0xff] %v2668
      %2685 = vst [vmem:[%s318 + $0x48] sm:$0xff] %v2669
      %2686 = vst [vmem:[%s318 + $0x50] sm:$0xff] %v2670
      %2687 = vst [vmem:[%s318 + $0x58] sm:$0xff] %v2671
      %2688 = vst [vmem:[%s318 + $0x60] sm:$0xff] %v2672
      %2689 = vst [vmem:[%s318 + $0x68] sm:$0xff] %v2673
      %2690 = vst [vmem:[%s318 + $0x70] sm:$0xff] %v2674
      %2691 = vst [vmem:[%s318 + $0x78] sm:$0xff] %v2675
      %p2692 = scmp.lt.s32.totalorder %s18, 1
      %s2693 = scalar_select %p2692, %s18, 1
      %s2694 = smul.addr %s2693, 16
      %s2695 = smul.addr %s2694, 8
      %s2696 = scalar_lea.vmem %s7, %s2695
      // Predicated region
      $region49: #{segmentation_gnn_forward.1} parent=47 // pred_check
        %p2697 = pneg %p198
      $region50: #{segmentation_gnn_forward.1} parent=47 // pred_check_branch
        %2699 = sbr.rel (%p2697) target = $region52
      $region51: #{segmentation_gnn_forward.1} parent=47 // pred_region
        _
      $region52: #{segmentation_gnn_forward.1} parent=47 // pred_fallthru
        _
    $region48: #{segmentation_gnn_forward.1} parent=5 // pred_fallthru
      _
    %p2700 = scmp.le.s32.totalorder 2, %s13
    // Predicated region
    $region53: #{segmentation_gnn_forward.1} parent=5 // pred_check
      %p2701 = pneg %p2700
    $region54: #{segmentation_gnn_forward.1} parent=5 // pred_check_branch
      %2703 = sbr.rel (%p2701) target = $region56
    $region55: #{segmentation_gnn_forward.1} parent=5 // pred_region
      %s2704 = ssub.s32 %s13, 2
      // Predicated region
      $region57: #{segmentation_gnn_forward.1} parent=55 // pred_check
        %p2705 = pneg %p204
      $region58: #{segmentation_gnn_forward.1} parent=55 // pred_check_branch
        %2707 = sbr.rel (%p2705) target = $region60
      $region59: #{segmentation_gnn_forward.1} parent=55 // pred_region
        %p2708 = scmp.lt.s32.totalorder %s19, 1
        %s2709 = scalar_select %p2708, %s19, 1
        %s2710 = smul.addr %s2709, 16
        %s2711 = smul.addr %s2710, 8
        %s2712 = scalar_lea.vmem %s7, %s2711
      $region60: #{segmentation_gnn_forward.1} parent=55 // pred_fallthru
        _
    $region56: #{segmentation_gnn_forward.1} parent=5 // pred_fallthru
      _
  $region6: #{segmentation_gnn_forward.1} parent=0 // loop_footer
    %s17 = sadd.s32 1, %s13
  $region7: #{segmentation_gnn_forward.1} parent=0 // loop_footer_branch
    %12 = sbr.rel target = $region3
  $region8: #{segmentation_gnn_forward.1} parent=0 // loop_exit
    _

</llo_original>
